<compile_context>
chip_gen: v7x
topology: tpu7x:2x2x1
jax: 0.10.0
libtpu: 0.0.40
codegen_flags: <defaults>
</compile_context>

<pallas_src>
import functools
import math

import jax
import jax.numpy as jnp
from jax import lax
from jax.experimental import pallas as pl
from jax.experimental.pallas import tpu as pltpu


def _posterior_z_kernel(
    x_ref, dt_ref, eps_ref,
    wih_ref, whh_ref, blstm_ref,
    wf1_ref, bf1_ref, wfused_ref, bfused_ref,
    wout_ref, bout_ref,
    wt_ref, bt_ref,                 # SMEM scalars
    out_ref,                        # (B_pad, out_pad) packed: z | mu | std | log_p | 0-pad
    gx_ref, gate_ref, h_ref, c_ref,  # VMEM scratch
    *, batch_pad, hidden_dim, out_dim, chunk_t, out_pad,
):
    H = hidden_dim
    K = out_dim
    Bp = batch_pad
    TC = chunk_t

    c_idx = pl.program_id(0)
    n_chunks = pl.num_programs(0)

    # ---- Carry init on the first chunk. ----
    @pl.when(c_idx == 0)
    def _():
        h_ref[...] = jnp.zeros_like(h_ref)
        c_ref[...] = jnp.zeros_like(c_ref)

    # ---- Hoist recurrence weights (constant block index => DMA'd once). ----
    whh = whh_ref[...]          # (H, 4H)   bf16
    wf1 = wf1_ref[...]          # (H, F)    bf16
    bf1 = bf1_ref[...]          # (1, F)    f32
    wfused = wfused_ref[...]    # (F, 4H)   bf16  (= wf2 @ whh, fused in wrapper)

    # ---- Per-chunk loop-invariant precompute (off the serial critical path).
    # TODO(synk): the exact stribor CouplingFlow/ResNetFlow + time_net of the
    # original ContinuousLSTMLayer is approximated by a single time-gated tanh
    # residual block (scalar tanh time gate) with matching shapes.
    wt = wt_ref[0]
    bt = bt_ref[0]
    gate2d = jnp.tanh(dt_ref[...] * wt + bt)                      # (TC*Bp, 1) f32
    gate_ref[...] = gate2d

    # Input projection for the whole chunk + LSTM bias + gate-scaled fused
    # flow bias (bfused = bf2 @ whh).
    gx_ref[...] = (
        jnp.dot(x_ref[...], wih_ref[...], preferred_element_type=jnp.float32)
        + blstm_ref[...]
        + gate2d * bfused_ref[...]
    )                                                             # (TC*Bp, 4H) f32

    def step(s, carry):
        h, c = carry
        row = pl.multiple_of(s * Bp, Bp)          # Bp % 8 == 0 -> aligned tiles
        gx_s = gx_ref[pl.ds(row, Bp), :]          # (Bp, 4H)  unmasked load
        gt_col = gate_ref[pl.ds(row, Bp), :]      # (Bp, 1)

        h_b = h.astype(jnp.bfloat16)
        # Gate folded into rr BEFORE the matmul (commutes through the product):
        # gating is (Bp,F) VPU work instead of (Bp,4H) on the matmul output.
        rr = gt_col * jnp.tanh(
            jnp.dot(h_b, wf1, preferred_element_type=jnp.float32) + bf1)
        gates = (gx_s
                 + jnp.dot(h_b, whh, preferred_element_type=jnp.float32)
                 + jnp.dot(rr.astype(jnp.bfloat16), wfused,
                           preferred_element_type=jnp.float32))   # (Bp, 4H)

        # Full-width activations (EUP), then slice gates (PyTorch order i,f,g,o).
        sig = jax.nn.sigmoid(gates)
        tnh = jnp.tanh(gates)
        i = sig[:, 0 * H:1 * H]
        f = sig[:, 1 * H:2 * H]
        g = tnh[:, 2 * H:3 * H]
        o = sig[:, 3 * H:4 * H]

        c = f * c + i * g
        h = o * jnp.tanh(c)
        return (h, c)

    # Full unroll only for short chunks; partial unroll bounds vreg pressure.
    unroll = True if TC <= 16 else 8
    h_T, c_T = lax.fori_loop(0, TC, step, (h_ref[...], c_ref[...]),
                             unroll=unroll)
    h_ref[...] = h_T
    c_ref[...] = c_T

    # ---- Epilogue on last chunk: Linear(H, 2K), clamp, exp, rsample, log_p.
    @pl.when(c_idx == n_chunks - 1)
    def _():
        head = (jnp.dot(h_T.astype(jnp.bfloat16), wout_ref[...],
                        preferred_element_type=jnp.float32)
                + bout_ref[...])                                  # (Bp, 2K)
        mu = head[:, :K]
        log_std = jnp.clip(head[:, K:2 * K], -20.0, 2.0)
        std = jnp.exp(log_std)

        eps = eps_ref[...]                                        # (Bp, K)
        z = mu + std * eps
        # log_prob(z) with z = mu + std*eps  =>  (z - mu)/std == eps exactly.
        log_p = (jnp.sum(-0.5 * (eps * eps) - log_std, axis=-1, keepdims=True)
                 - 0.5 * K * math.log(2.0 * math.pi))             # (Bp, 1)

        pieces = [z, mu, std, jnp.broadcast_to(log_p, (Bp, K))]
        pad = out_pad - 4 * K
        if pad > 0:
            pieces.append(jnp.zeros((Bp, pad), jnp.float32))
        out_ref[...] = jnp.concatenate(pieces, axis=-1)           # lane-dense


def init_params(key, dim, hidden_state_dim, hidden_dim, out_dim):
    """Deterministic synthetic parameter init (shapes follow the module)."""
    H, F, K = hidden_state_dim, hidden_dim, out_dim
    ks = jax.random.split(key, 10)
    sH = 1.0 / math.sqrt(H)
    sF = 1.0 / math.sqrt(F)

    def u(k, shape, scale):
        return jax.random.uniform(k, shape, jnp.float32, -scale, scale)

    return dict(
        # nn.LSTMCell(dim, H): stored transposed / 2-D for lane-major matmuls.
        wih=u(ks[0], (dim, 4 * H), sH),
        whh=u(ks[1], (H, 4 * H), sH),
        blstm=u(ks[2], (1, 4 * H), sH),
        # flow residual MLP (H -> F -> H) + scalar time gate.
        wf1=u(ks[3], (H, F), sH),
        bf1=u(ks[4], (1, F), sH),
        wf2=u(ks[5], (F, H), sF),
        bf2=u(ks[6], (1, H), sF),
        wt=u(ks[7], (1, 1), 1.0),
        bt=jnp.zeros((1, 1), jnp.float32),
        # final_layer: nn.Linear(H, 2*K)
        wout=u(ks[8], (H, 2 * K), sH),
        bout=u(ks[9], (1, 2 * K), sH),
    )


def posterior_z_forward(x, t, params, eps, *, chunk_t=None):
    """x: (B, T, D), t: (B, T), eps: (B, K).  Returns (z, mu, std, log_p)."""
    B, T, D = x.shape
    H = params["whh"].shape[0]
    F = params["wf1"].shape[1]
    K = params["wout"].shape[1] // 2

    # Pad the batch axis up to the f32 sublane tile so every per-step slice
    # is sublane-aligned and unmasked.
    Bp = ((B + 7) // 8) * 8

    if chunk_t is None:
        chunk_t = T
        for c in range(min(T, 64), 0, -1):
            if T % c == 0:
                chunk_t = c
                break
    assert T % chunk_t == 0, "chunk_t must divide T"
    n_chunks = T // chunk_t
    rows = chunk_t * Bp

    # dt exactly as in the torch forward: t_prev[:,0]=0, t_prev[:,1:]=t[:,:-1]
    t_prev = jnp.concatenate([jnp.zeros_like(t[:, :1]), t[:, :-1]], axis=1)
    dt = t - t_prev + 1e-8

    # time-major, batch padded, flattened to 2-D (lane dim = features).
    x_tm = jnp.transpose(x, (1, 0, 2)).astype(jnp.float32)        # (T, B, D)
    x_tm = jnp.pad(x_tm, ((0, 0), (0, Bp - B), (0, 0)))
    x2d = x_tm.reshape(T * Bp, D).astype(jnp.bfloat16)            # MXU operand

    dt_tm = jnp.transpose(dt, (1, 0)).astype(jnp.float32)         # (T, B)
    dt_tm = jnp.pad(dt_tm, ((0, 0), (0, Bp - B)))
    dt2d = dt_tm.reshape(T * Bp, 1)

    eps_p = jnp.pad(eps.astype(jnp.float32), ((0, Bp - B), (0, 0)))  # (Bp, K)

    # Fuse the flow output projection into the LSTM hidden matmul:
    #   (r @ wf2 + bf2) @ whh == r @ (wf2 @ whh) + bf2 @ whh
    wfused = jnp.dot(params["wf2"], params["whh"])   # (F, 4H)
    bfused = jnp.dot(params["bf2"], params["whh"])   # (1, 4H)

    # bf16 MXU operands; all elementwise math stays f32 inside the kernel.
    wih = params["wih"].astype(jnp.bfloat16)
    whh = params["whh"].astype(jnp.bfloat16)
    wf1 = params["wf1"].astype(jnp.bfloat16)
    wfused_b = wfused.astype(jnp.bfloat16)
    wout = params["wout"].astype(jnp.bfloat16)

    out_pad = max(128, ((4 * K + 127) // 128) * 128)   # lane-dense output tile

    kernel = functools.partial(
        _posterior_z_kernel, batch_pad=Bp, hidden_dim=H, out_dim=K,
        chunk_t=chunk_t, out_pad=out_pad)

    smem = pl.BlockSpec(memory_space=pltpu.MemorySpace.SMEM)

    in_specs = [
        pl.BlockSpec((rows, D), lambda c: (c, 0)),        # x2d  (streamed)
        pl.BlockSpec((rows, 1), lambda c: (c, 0)),        # dt2d (streamed)
        pl.BlockSpec((Bp, K), lambda c: (0, 0)),          # eps
        pl.BlockSpec((D, 4 * H), lambda c: (0, 0)),       # wih
        pl.BlockSpec((H, 4 * H), lambda c: (0, 0)),       # whh
        pl.BlockSpec((1, 4 * H), lambda c: (0, 0)),       # blstm
        pl.BlockSpec((H, F), lambda c: (0, 0)),           # wf1
        pl.BlockSpec((1, F), lambda c: (0, 0)),           # bf1
        pl.BlockSpec((F, 4 * H), lambda c: (0, 0)),       # wfused
        pl.BlockSpec((1, 4 * H), lambda c: (0, 0)),       # bfused
        pl.BlockSpec((H, 2 * K), lambda c: (0, 0)),       # wout
        pl.BlockSpec((1, 2 * K), lambda c: (0, 0)),       # bout
        smem,                                             # wt
        smem,                                             # bt
    ]

    packed = pl.pallas_call(
        kernel,
        out_shape=jax.ShapeDtypeStruct((Bp, out_pad), jnp.float32),
        grid=(n_chunks,),
        in_specs=in_specs,
        out_specs=pl.BlockSpec((Bp, out_pad), lambda c: (0, 0)),
        scratch_shapes=[
            pltpu.VMEM((rows, 4 * H), jnp.float32),   # per-chunk x-projection
            pltpu.VMEM((rows, 1), jnp.float32),       # per-chunk time-gate col
            pltpu.VMEM((Bp, H), jnp.float32),         # h carry (persists)
            pltpu.VMEM((Bp, H), jnp.float32),         # c carry (persists)
        ],
        compiler_params=pltpu.CompilerParams(
            dimension_semantics=("arbitrary",)),
    )(x2d, dt2d, eps_p,
      wih, whh, params["blstm"],
      wf1, params["bf1"], wfused_b, bfused,
      wout, params["bout"],
      params["wt"].reshape(1).astype(jnp.float32),
      params["bt"].reshape(1).astype(jnp.float32))

    z = packed[:B, 0 * K:1 * K]
    mu = packed[:B, 1 * K:2 * K]
    std = packed[:B, 2 * K:3 * K]
    log_p = packed[:B, 3 * K:3 * K + 1]
    return z, mu, std, log_p


if __name__ == "__main__":
    B, T, D = 2, 8, 4          # batch, sequence length, input dim
    H, FLOW_H, K = 32, 32, 8   # hidden_state_dim, hidden_dim, out_dim

    key = jax.random.PRNGKey(0)
    kx, kt, keps, kparam = jax.random.split(key, 4)

    x = jax.random.normal(kx, (B, T, D), jnp.float32)
    # strictly increasing observation times per batch element
    t = jnp.cumsum(jax.random.uniform(kt, (B, T), jnp.float32, 0.05, 0.5), axis=1)
    eps = jax.random.normal(keps, (B, K), jnp.float32)

    params = init_params(kparam, D, H, FLOW_H, K)

    # chunk_t=4 -> grid of 2 T-chunks (exercises the streamed / carried path).
    z, mu, std, log_p = posterior_z_forward(x, t, params, eps, chunk_t=4)
    jax.block_until_ready((z, mu, std, log_p))

    assert z.shape == (B, K)
    assert mu.shape == (B, K)
    assert std.shape == (B, K)
    assert log_p.shape == (B, 1)
    assert bool(jnp.all(jnp.isfinite(z)))
    assert bool(jnp.all(jnp.isfinite(log_p)))
    assert bool(jnp.all(std > 0))
    print("KERNEL_OK")
</pallas_src>

<mosaic_0001>
module attributes {stable_mosaic.version = 11 : i64} {
  func.func @_posterior_z_kernel(%arg0: i32, %arg1: memref<32x4xbf16, #tpu.memory_space<vmem>>, %arg2: memref<32x1xf32, #tpu.memory_space<vmem>>, %arg3: memref<8x8xf32, #tpu.memory_space<vmem>>, %arg4: memref<4x128xbf16, #tpu.memory_space<vmem>>, %arg5: memref<32x128xbf16, #tpu.memory_space<vmem>>, %arg6: memref<1x128xf32, #tpu.memory_space<vmem>>, %arg7: memref<32x32xbf16, #tpu.memory_space<vmem>>, %arg8: memref<1x32xf32, #tpu.memory_space<vmem>>, %arg9: memref<32x128xbf16, #tpu.memory_space<vmem>>, %arg10: memref<1x128xf32, #tpu.memory_space<vmem>>, %arg11: memref<32x16xbf16, #tpu.memory_space<vmem>>, %arg12: memref<1x16xf32, #tpu.memory_space<vmem>>, %arg13: memref<1xf32, #tpu.memory_space<smem>>, %arg14: memref<1xf32, #tpu.memory_space<smem>>, %arg15: memref<8x128xf32, #tpu.memory_space<vmem>>, %arg16: memref<32x128xf32, #tpu.memory_space<vmem>>, %arg17: memref<32x1xf32, #tpu.memory_space<vmem>>, %arg18: memref<8x32xf32, #tpu.memory_space<vmem>>, %arg19: memref<8x32xf32, #tpu.memory_space<vmem>>) attributes {dimension_semantics = [#tpu.dimension_semantics<arbitrary>], iteration_bounds = array<i64: 2>, scalar_prefetch = 0 : i64, scratch_operands = 4 : i64, tpu.core_type = #tpu.core_type<tc>, window_params = [{transform_indices = @transform_0, window_bounds = array<i64: 32, 4>}, {transform_indices = @transform_1, window_bounds = array<i64: 32, 1>}, {pipeline_mode = #tpu.pipeline_mode<synchronous>, transform_indices = @transform_2, window_bounds = array<i64: 8, 8>}, {pipeline_mode = #tpu.pipeline_mode<synchronous>, transform_indices = @transform_3, window_bounds = array<i64: 4, 128>}, {pipeline_mode = #tpu.pipeline_mode<synchronous>, transform_indices = @transform_4, window_bounds = array<i64: 32, 128>}, {pipeline_mode = #tpu.pipeline_mode<synchronous>, transform_indices = @transform_5, window_bounds = array<i64: 1, 128>}, {pipeline_mode = #tpu.pipeline_mode<synchronous>, transform_indices = @transform_6, window_bounds = array<i64: 32, 32>}, {pipeline_mode = #tpu.pipeline_mode<synchronous>, transform_indices = @transform_7, window_bounds = array<i64: 1, 32>}, {pipeline_mode = #tpu.pipeline_mode<synchronous>, transform_indices = @transform_8, window_bounds = array<i64: 32, 128>}, {pipeline_mode = #tpu.pipeline_mode<synchronous>, transform_indices = @transform_9, window_bounds = array<i64: 1, 128>}, {pipeline_mode = #tpu.pipeline_mode<synchronous>, transform_indices = @transform_10, window_bounds = array<i64: 32, 16>}, {pipeline_mode = #tpu.pipeline_mode<synchronous>, transform_indices = @transform_11, window_bounds = array<i64: 1, 16>}, {transform_indices = @transform_12, window_bounds = array<i64: 1>}, {transform_indices = @transform_13, window_bounds = array<i64: 1>}, {pipeline_mode = #tpu.pipeline_mode<synchronous>, transform_indices = @transform_14, window_bounds = array<i64: 8, 128>}]} {
    %c0_i32 = arith.constant 0 : i32
    %0 = arith.cmpi eq, %arg0, %c0_i32 : i32
    %1 = arith.extui %0 : i1 to i32
    %c0_i32_0 = arith.constant 0 : i32
    %2 = arith.cmpi ne, %1, %c0_i32_0 : i32
    scf.if %2 {
      %cst_62 = arith.constant 0.000000e+00 : f32
      %167 = vector.broadcast %cst_62 : f32 to vector<8x32xf32>
      %c0_63 = arith.constant 0 : index
      %c0_64 = arith.constant 0 : index
      %168 = vector.load %arg18[%c0_63, %c0_64] : memref<8x32xf32, #tpu.memory_space<vmem>>, vector<8x32xf32>
      tpu.vector_store %arg18[%c0_63, %c0_64], %167 {strides = array<i32>} : memref<8x32xf32, #tpu.memory_space<vmem>>, vector<8x32xf32>,
      %cst_65 = arith.constant 0.000000e+00 : f32
      %169 = vector.broadcast %cst_65 : f32 to vector<8x32xf32>
      %c0_66 = arith.constant 0 : index
      %c0_67 = arith.constant 0 : index
      %170 = vector.load %arg19[%c0_66, %c0_67] : memref<8x32xf32, #tpu.memory_space<vmem>>, vector<8x32xf32>
      tpu.vector_store %arg19[%c0_66, %c0_67], %169 {strides = array<i32>} : memref<8x32xf32, #tpu.memory_space<vmem>>, vector<8x32xf32>,
    } else {
    }
    %c0 = arith.constant 0 : index
    %c0_1 = arith.constant 0 : index
    %3 = vector.load %arg5[%c0, %c0_1] : memref<32x128xbf16, #tpu.memory_space<vmem>>, vector<32x128xbf16>
    %c0_2 = arith.constant 0 : index
    %c0_3 = arith.constant 0 : index
    %4 = vector.load %arg7[%c0_2, %c0_3] : memref<32x32xbf16, #tpu.memory_space<vmem>>, vector<32x32xbf16>
    %c0_4 = arith.constant 0 : index
    %c0_5 = arith.constant 0 : index
    %5 = vector.load %arg8[%c0_4, %c0_5] : memref<1x32xf32, #tpu.memory_space<vmem>>, vector<1x32xf32>
    %c0_6 = arith.constant 0 : index
    %c0_7 = arith.constant 0 : index
    %6 = vector.load %arg9[%c0_6, %c0_7] : memref<32x128xbf16, #tpu.memory_space<vmem>>, vector<32x128xbf16>
    %c0_8 = arith.constant 0 : index
    %7 = memref.load %arg13[%c0_8] : memref<1xf32, #tpu.memory_space<smem>>
    %c0_9 = arith.constant 0 : index
    %8 = memref.load %arg14[%c0_9] : memref<1xf32, #tpu.memory_space<smem>>
    %c0_10 = arith.constant 0 : index
    %c0_11 = arith.constant 0 : index
    %9 = vector.load %arg2[%c0_10, %c0_11] : memref<32x1xf32, #tpu.memory_space<vmem>>, vector<32x1xf32>
    %10 = vector.broadcast %7 : f32 to vector<32x1xf32>
    %11 = arith.mulf %9, %10 : vector<32x1xf32>
    %12 = vector.broadcast %8 : f32 to vector<32x1xf32>
    %13 = arith.addf %11, %12 : vector<32x1xf32>
    %14 = math.tanh %13 : vector<32x1xf32>
    %c0_12 = arith.constant 0 : index
    %c0_13 = arith.constant 0 : index
    %15 = vector.load %arg17[%c0_12, %c0_13] : memref<32x1xf32, #tpu.memory_space<vmem>>, vector<32x1xf32>
    tpu.vector_store %arg17[%c0_12, %c0_13], %14 {strides = array<i32>} : memref<32x1xf32, #tpu.memory_space<vmem>>, vector<32x1xf32>,
    %c0_14 = arith.constant 0 : index
    %c0_15 = arith.constant 0 : index
    %16 = vector.load %arg1[%c0_14, %c0_15] : memref<32x4xbf16, #tpu.memory_space<vmem>>, vector<32x4xbf16>
    %c0_16 = arith.constant 0 : index
    %c0_17 = arith.constant 0 : index
    %17 = vector.load %arg4[%c0_16, %c0_17] : memref<4x128xbf16, #tpu.memory_space<vmem>>, vector<4x128xbf16>
    %cst = arith.constant dense<0.000000e+00> : vector<32x128xf32>
    %18 = tpu.matmul %16, %17, %cst {dimension_numbers = #tpu.dot_dimension_numbers<[1], [0], [0], [1], [0, 0, 1, 1], [], []>} : vector<32x4xbf16>, vector<4x128xbf16>, vector<32x128xf32> -> vector<32x128xf32>
    %c0_18 = arith.constant 0 : index
    %c0_19 = arith.constant 0 : index
    %19 = vector.load %arg6[%c0_18, %c0_19] : memref<1x128xf32, #tpu.memory_space<vmem>>, vector<1x128xf32>
    %20 = vector.broadcast %19 : vector<1x128xf32> to vector<32x128xf32>
    %21 = arith.addf %18, %20 : vector<32x128xf32>
    %c0_20 = arith.constant 0 : index
    %c0_21 = arith.constant 0 : index
    %22 = vector.load %arg10[%c0_20, %c0_21] : memref<1x128xf32, #tpu.memory_space<vmem>>, vector<1x128xf32>
    %23 = vector.broadcast %14 : vector<32x1xf32> to vector<32x128xf32>
    %24 = vector.broadcast %22 : vector<1x128xf32> to vector<32x128xf32>
    %25 = arith.mulf %23, %24 : vector<32x128xf32>
    %26 = arith.addf %21, %25 : vector<32x128xf32>
    %c0_22 = arith.constant 0 : index
    %c0_23 = arith.constant 0 : index
    %27 = vector.load %arg16[%c0_22, %c0_23] : memref<32x128xf32, #tpu.memory_space<vmem>>, vector<32x128xf32>
    tpu.vector_store %arg16[%c0_22, %c0_23], %26 {strides = array<i32>} : memref<32x128xf32, #tpu.memory_space<vmem>>, vector<32x128xf32>,
    %c0_24 = arith.constant 0 : index
    %c0_25 = arith.constant 0 : index
    %28 = vector.load %arg18[%c0_24, %c0_25] : memref<8x32xf32, #tpu.memory_space<vmem>>, vector<8x32xf32>
    %c0_26 = arith.constant 0 : index
    %c0_27 = arith.constant 0 : index
    %29 = vector.load %arg19[%c0_26, %c0_27] : memref<8x32xf32, #tpu.memory_space<vmem>>, vector<8x32xf32>
    %c0_i32_28 = arith.constant 0 : i32
    %c8_i32 = arith.constant 8 : i32
    %30 = arith.muli %c0_i32_28, %c8_i32 : i32
    %31 = tpu.assume_multiple %30, 8 : i32
    %32 = arith.index_cast %31 : i32 to index
    %c0_29 = arith.constant 0 : index
    %33 = vector.load %arg16[%32, %c0_29] : memref<32x128xf32, #tpu.memory_space<vmem>>, vector<8x128xf32>
    %34 = arith.index_cast %31 : i32 to index
    %c0_30 = arith.constant 0 : index
    %35 = vector.load %arg17[%34, %c0_30] : memref<32x1xf32, #tpu.memory_space<vmem>>, vector<8x1xf32>
    %36 = arith.truncf %28 : vector<8x32xf32> to vector<8x32xbf16>
    %cst_31 = arith.constant dense<0.000000e+00> : vector<8x32xf32>
    %37 = tpu.matmul %36, %4, %cst_31 {dimension_numbers = #tpu.dot_dimension_numbers<[1], [0], [0], [1], [0, 0, 1, 1], [], []>} : vector<8x32xbf16>, vector<32x32xbf16>, vector<8x32xf32> -> vector<8x32xf32>
    %38 = vector.broadcast %5 : vector<1x32xf32> to vector<8x32xf32>
    %39 = arith.addf %37, %38 : vector<8x32xf32>
    %40 = math.tanh %39 : vector<8x32xf32>
    %41 = vector.broadcast %35 : vector<8x1xf32> to vector<8x32xf32>
    %42 = arith.mulf %41, %40 : vector<8x32xf32>
    %cst_32 = arith.constant dense<0.000000e+00> : vector<8x128xf32>
    %43 = tpu.matmul %36, %3, %cst_32 {dimension_numbers = #tpu.dot_dimension_numbers<[1], [0], [0], [1], [0, 0, 1, 1], [], []>} : vector<8x32xbf16>, vector<32x128xbf16>, vector<8x128xf32> -> vector<8x128xf32>
    %44 = arith.addf %33, %43 : vector<8x128xf32>
    %45 = arith.truncf %42 : vector<8x32xf32> to vector<8x32xbf16>
    %cst_33 = arith.constant dense<0.000000e+00> : vector<8x128xf32>
    %46 = tpu.matmul %45, %6, %cst_33 {dimension_numbers = #tpu.dot_dimension_numbers<[1], [0], [0], [1], [0, 0, 1, 1], [], []>} : vector<8x32xbf16>, vector<32x128xbf16>, vector<8x128xf32> -> vector<8x128xf32>
    %47 = arith.addf %44, %46 : vector<8x128xf32>
    %48 = arith.negf %47 : vector<8x128xf32>
    %49 = math.exp %48 : vector<8x128xf32>
    %cst_34 = arith.constant 1.000000e+00 : f32
    %50 = vector.broadcast %cst_34 : f32 to vector<8x128xf32>
    %51 = arith.addf %50, %49 : vector<8x128xf32>
    %52 = arith.divf %50, %51 : vector<8x128xf32>
    %53 = math.tanh %47 : vector<8x128xf32>
    %54 = vector.extract_strided_slice %52 {offsets = [0, 0], sizes = [8, 32], strides = [1, 1]} : vector<8x128xf32> to vector<8x32xf32>
    %55 = vector.extract_strided_slice %52 {offsets = [0, 32], sizes = [8, 32], strides = [1, 1]} : vector<8x128xf32> to vector<8x32xf32>
    %56 = vector.extract_strided_slice %53 {offsets = [0, 64], sizes = [8, 32], strides = [1, 1]} : vector<8x128xf32> to vector<8x32xf32>
    %57 = vector.extract_strided_slice %52 {offsets = [0, 96], sizes = [8, 32], strides = [1, 1]} : vector<8x128xf32> to vector<8x32xf32>
    %58 = arith.mulf %55, %29 : vector<8x32xf32>
    %59 = arith.mulf %54, %56 : vector<8x32xf32>
    %60 = arith.addf %58, %59 : vector<8x32xf32>
    %61 = math.tanh %60 : vector<8x32xf32>
    %62 = arith.mulf %57, %61 : vector<8x32xf32>
    %c1_i32 = arith.constant 1 : i32
    %c8_i32_35 = arith.constant 8 : i32
    %63 = arith.muli %c1_i32, %c8_i32_35 : i32
    %64 = tpu.assume_multiple %63, 8 : i32
    %65 = arith.index_cast %64 : i32 to index
    %c0_36 = arith.constant 0 : index
    %66 = vector.load %arg16[%65, %c0_36] : memref<32x128xf32, #tpu.memory_space<vmem>>, vector<8x128xf32>
    %67 = arith.index_cast %64 : i32 to index
    %c0_37 = arith.constant 0 : index
    %68 = vector.load %arg17[%67, %c0_37] : memref<32x1xf32, #tpu.memory_space<vmem>>, vector<8x1xf32>
    %69 = arith.truncf %62 : vector<8x32xf32> to vector<8x32xbf16>
    %cst_38 = arith.constant dense<0.000000e+00> : vector<8x32xf32>
    %70 = tpu.matmul %69, %4, %cst_38 {dimension_numbers = #tpu.dot_dimension_numbers<[1], [0], [0], [1], [0, 0, 1, 1], [], []>} : vector<8x32xbf16>, vector<32x32xbf16>, vector<8x32xf32> -> vector<8x32xf32>
    %71 = vector.broadcast %5 : vector<1x32xf32> to vector<8x32xf32>
    %72 = arith.addf %70, %71 : vector<8x32xf32>
    %73 = math.tanh %72 : vector<8x32xf32>
    %74 = vector.broadcast %68 : vector<8x1xf32> to vector<8x32xf32>
    %75 = arith.mulf %74, %73 : vector<8x32xf32>
    %cst_39 = arith.constant dense<0.000000e+00> : vector<8x128xf32>
    %76 = tpu.matmul %69, %3, %cst_39 {dimension_numbers = #tpu.dot_dimension_numbers<[1], [0], [0], [1], [0, 0, 1, 1], [], []>} : vector<8x32xbf16>, vector<32x128xbf16>, vector<8x128xf32> -> vector<8x128xf32>
    %77 = arith.addf %66, %76 : vector<8x128xf32>
    %78 = arith.truncf %75 : vector<8x32xf32> to vector<8x32xbf16>
    %cst_40 = arith.constant dense<0.000000e+00> : vector<8x128xf32>
    %79 = tpu.matmul %78, %6, %cst_40 {dimension_numbers = #tpu.dot_dimension_numbers<[1], [0], [0], [1], [0, 0, 1, 1], [], []>} : vector<8x32xbf16>, vector<32x128xbf16>, vector<8x128xf32> -> vector<8x128xf32>
    %80 = arith.addf %77, %79 : vector<8x128xf32>
    %81 = arith.negf %80 : vector<8x128xf32>
    %82 = math.exp %81 : vector<8x128xf32>
    %cst_41 = arith.constant 1.000000e+00 : f32
    %83 = vector.broadcast %cst_41 : f32 to vector<8x128xf32>
    %84 = arith.addf %83, %82 : vector<8x128xf32>
    %85 = arith.divf %83, %84 : vector<8x128xf32>
    %86 = math.tanh %80 : vector<8x128xf32>
    %87 = vector.extract_strided_slice %85 {offsets = [0, 0], sizes = [8, 32], strides = [1, 1]} : vector<8x128xf32> to vector<8x32xf32>
    %88 = vector.extract_strided_slice %85 {offsets = [0, 32], sizes = [8, 32], strides = [1, 1]} : vector<8x128xf32> to vector<8x32xf32>
    %89 = vector.extract_strided_slice %86 {offsets = [0, 64], sizes = [8, 32], strides = [1, 1]} : vector<8x128xf32> to vector<8x32xf32>
    %90 = vector.extract_strided_slice %85 {offsets = [0, 96], sizes = [8, 32], strides = [1, 1]} : vector<8x128xf32> to vector<8x32xf32>
    %91 = arith.mulf %88, %60 : vector<8x32xf32>
    %92 = arith.mulf %87, %89 : vector<8x32xf32>
    %93 = arith.addf %91, %92 : vector<8x32xf32>
    %94 = math.tanh %93 : vector<8x32xf32>
    %95 = arith.mulf %90, %94 : vector<8x32xf32>
    %c2_i32 = arith.constant 2 : i32
    %c8_i32_42 = arith.constant 8 : i32
    %96 = arith.muli %c2_i32, %c8_i32_42 : i32
    %97 = tpu.assume_multiple %96, 8 : i32
    %98 = arith.index_cast %97 : i32 to index
    %c0_43 = arith.constant 0 : index
    %99 = vector.load %arg16[%98, %c0_43] : memref<32x128xf32, #tpu.memory_space<vmem>>, vector<8x128xf32>
    %100 = arith.index_cast %97 : i32 to index
    %c0_44 = arith.constant 0 : index
    %101 = vector.load %arg17[%100, %c0_44] : memref<32x1xf32, #tpu.memory_space<vmem>>, vector<8x1xf32>
    %102 = arith.truncf %95 : vector<8x32xf32> to vector<8x32xbf16>
    %cst_45 = arith.constant dense<0.000000e+00> : vector<8x32xf32>
    %103 = tpu.matmul %102, %4, %cst_45 {dimension_numbers = #tpu.dot_dimension_numbers<[1], [0], [0], [1], [0, 0, 1, 1], [], []>} : vector<8x32xbf16>, vector<32x32xbf16>, vector<8x32xf32> -> vector<8x32xf32>
    %104 = vector.broadcast %5 : vector<1x32xf32> to vector<8x32xf32>
    %105 = arith.addf %103, %104 : vector<8x32xf32>
    %106 = math.tanh %105 : vector<8x32xf32>
    %107 = vector.broadcast %101 : vector<8x1xf32> to vector<8x32xf32>
    %108 = arith.mulf %107, %106 : vector<8x32xf32>
    %cst_46 = arith.constant dense<0.000000e+00> : vector<8x128xf32>
    %109 = tpu.matmul %102, %3, %cst_46 {dimension_numbers = #tpu.dot_dimension_numbers<[1], [0], [0], [1], [0, 0, 1, 1], [], []>} : vector<8x32xbf16>, vector<32x128xbf16>, vector<8x128xf32> -> vector<8x128xf32>
    %110 = arith.addf %99, %109 : vector<8x128xf32>
    %111 = arith.truncf %108 : vector<8x32xf32> to vector<8x32xbf16>
    %cst_47 = arith.constant dense<0.000000e+00> : vector<8x128xf32>
    %112 = tpu.matmul %111, %6, %cst_47 {dimension_numbers = #tpu.dot_dimension_numbers<[1], [0], [0], [1], [0, 0, 1, 1], [], []>} : vector<8x32xbf16>, vector<32x128xbf16>, vector<8x128xf32> -> vector<8x128xf32>
    %113 = arith.addf %110, %112 : vector<8x128xf32>
    %114 = arith.negf %113 : vector<8x128xf32>
    %115 = math.exp %114 : vector<8x128xf32>
    %cst_48 = arith.constant 1.000000e+00 : f32
    %116 = vector.broadcast %cst_48 : f32 to vector<8x128xf32>
    %117 = arith.addf %116, %115 : vector<8x128xf32>
    %118 = arith.divf %116, %117 : vector<8x128xf32>
    %119 = math.tanh %113 : vector<8x128xf32>
    %120 = vector.extract_strided_slice %118 {offsets = [0, 0], sizes = [8, 32], strides = [1, 1]} : vector<8x128xf32> to vector<8x32xf32>
    %121 = vector.extract_strided_slice %118 {offsets = [0, 32], sizes = [8, 32], strides = [1, 1]} : vector<8x128xf32> to vector<8x32xf32>
    %122 = vector.extract_strided_slice %119 {offsets = [0, 64], sizes = [8, 32], strides = [1, 1]} : vector<8x128xf32> to vector<8x32xf32>
    %123 = vector.extract_strided_slice %118 {offsets = [0, 96], sizes = [8, 32], strides = [1, 1]} : vector<8x128xf32> to vector<8x32xf32>
    %124 = arith.mulf %121, %93 : vector<8x32xf32>
    %125 = arith.mulf %120, %122 : vector<8x32xf32>
    %126 = arith.addf %124, %125 : vector<8x32xf32>
    %127 = math.tanh %126 : vector<8x32xf32>
    %128 = arith.mulf %123, %127 : vector<8x32xf32>
    %c3_i32 = arith.constant 3 : i32
    %c8_i32_49 = arith.constant 8 : i32
    %129 = arith.muli %c3_i32, %c8_i32_49 : i32
    %130 = tpu.assume_multiple %129, 8 : i32
    %131 = arith.index_cast %130 : i32 to index
    %c0_50 = arith.constant 0 : index
    %132 = vector.load %arg16[%131, %c0_50] : memref<32x128xf32, #tpu.memory_space<vmem>>, vector<8x128xf32>
    %133 = arith.index_cast %130 : i32 to index
    %c0_51 = arith.constant 0 : index
    %134 = vector.load %arg17[%133, %c0_51] : memref<32x1xf32, #tpu.memory_space<vmem>>, vector<8x1xf32>
    %135 = arith.truncf %128 : vector<8x32xf32> to vector<8x32xbf16>
    %cst_52 = arith.constant dense<0.000000e+00> : vector<8x32xf32>
    %136 = tpu.matmul %135, %4, %cst_52 {dimension_numbers = #tpu.dot_dimension_numbers<[1], [0], [0], [1], [0, 0, 1, 1], [], []>} : vector<8x32xbf16>, vector<32x32xbf16>, vector<8x32xf32> -> vector<8x32xf32>
    %137 = vector.broadcast %5 : vector<1x32xf32> to vector<8x32xf32>
    %138 = arith.addf %136, %137 : vector<8x32xf32>
    %139 = math.tanh %138 : vector<8x32xf32>
    %140 = vector.broadcast %134 : vector<8x1xf32> to vector<8x32xf32>
    %141 = arith.mulf %140, %139 : vector<8x32xf32>
    %cst_53 = arith.constant dense<0.000000e+00> : vector<8x128xf32>
    %142 = tpu.matmul %135, %3, %cst_53 {dimension_numbers = #tpu.dot_dimension_numbers<[1], [0], [0], [1], [0, 0, 1, 1], [], []>} : vector<8x32xbf16>, vector<32x128xbf16>, vector<8x128xf32> -> vector<8x128xf32>
    %143 = arith.addf %132, %142 : vector<8x128xf32>
    %144 = arith.truncf %141 : vector<8x32xf32> to vector<8x32xbf16>
    %cst_54 = arith.constant dense<0.000000e+00> : vector<8x128xf32>
    %145 = tpu.matmul %144, %6, %cst_54 {dimension_numbers = #tpu.dot_dimension_numbers<[1], [0], [0], [1], [0, 0, 1, 1], [], []>} : vector<8x32xbf16>, vector<32x128xbf16>, vector<8x128xf32> -> vector<8x128xf32>
    %146 = arith.addf %143, %145 : vector<8x128xf32>
    %147 = arith.negf %146 : vector<8x128xf32>
    %148 = math.exp %147 : vector<8x128xf32>
    %cst_55 = arith.constant 1.000000e+00 : f32
    %149 = vector.broadcast %cst_55 : f32 to vector<8x128xf32>
    %150 = arith.addf %149, %148 : vector<8x128xf32>
    %151 = arith.divf %149, %150 : vector<8x128xf32>
    %152 = math.tanh %146 : vector<8x128xf32>
    %153 = vector.extract_strided_slice %151 {offsets = [0, 0], sizes = [8, 32], strides = [1, 1]} : vector<8x128xf32> to vector<8x32xf32>
    %154 = vector.extract_strided_slice %151 {offsets = [0, 32], sizes = [8, 32], strides = [1, 1]} : vector<8x128xf32> to vector<8x32xf32>
    %155 = vector.extract_strided_slice %152 {offsets = [0, 64], sizes = [8, 32], strides = [1, 1]} : vector<8x128xf32> to vector<8x32xf32>
    %156 = vector.extract_strided_slice %151 {offsets = [0, 96], sizes = [8, 32], strides = [1, 1]} : vector<8x128xf32> to vector<8x32xf32>
    %157 = arith.mulf %154, %126 : vector<8x32xf32>
    %158 = arith.mulf %153, %155 : vector<8x32xf32>
    %159 = arith.addf %157, %158 : vector<8x32xf32>
    %160 = math.tanh %159 : vector<8x32xf32>
    %161 = arith.mulf %156, %160 : vector<8x32xf32>
    %c4_i32 = arith.constant 4 : i32
    %c0_56 = arith.constant 0 : index
    %c0_57 = arith.constant 0 : index
    %162 = vector.load %arg18[%c0_56, %c0_57] : memref<8x32xf32, #tpu.memory_space<vmem>>, vector<8x32xf32>
    tpu.vector_store %arg18[%c0_56, %c0_57], %161 {strides = array<i32>} : memref<8x32xf32, #tpu.memory_space<vmem>>, vector<8x32xf32>,
    %c0_58 = arith.constant 0 : index
    %c0_59 = arith.constant 0 : index
    %163 = vector.load %arg19[%c0_58, %c0_59] : memref<8x32xf32, #tpu.memory_space<vmem>>, vector<8x32xf32>
    tpu.vector_store %arg19[%c0_58, %c0_59], %159 {strides = array<i32>} : memref<8x32xf32, #tpu.memory_space<vmem>>, vector<8x32xf32>,
    %c1_i32_60 = arith.constant 1 : i32
    %164 = arith.cmpi eq, %arg0, %c1_i32_60 : i32
    %165 = arith.extui %164 : i1 to i32
    %c0_i32_61 = arith.constant 0 : i32
    %166 = arith.cmpi ne, %165, %c0_i32_61 : i32
    scf.if %166 {
      %167 = arith.truncf %161 : vector<8x32xf32> to vector<8x32xbf16>
      %c0_62 = arith.constant 0 : index
      %c0_63 = arith.constant 0 : index
      %168 = vector.load %arg11[%c0_62, %c0_63] : memref<32x16xbf16, #tpu.memory_space<vmem>>, vector<32x16xbf16>
      %cst_64 = arith.constant dense<0.000000e+00> : vector<8x16xf32>
      %169 = tpu.matmul %167, %168, %cst_64 {dimension_numbers = #tpu.dot_dimension_numbers<[1], [0], [0], [1], [0, 0, 1, 1], [], []>} : vector<8x32xbf16>, vector<32x16xbf16>, vector<8x16xf32> -> vector<8x16xf32>
      %c0_65 = arith.constant 0 : index
      %c0_66 = arith.constant 0 : index
      %170 = vector.load %arg12[%c0_65, %c0_66] : memref<1x16xf32, #tpu.memory_space<vmem>>, vector<1x16xf32>
      %171 = vector.broadcast %170 : vector<1x16xf32> to vector<8x16xf32>
      %172 = arith.addf %169, %171 : vector<8x16xf32>
      %173 = vector.extract_strided_slice %172 {offsets = [0, 0], sizes = [8, 8], strides = [1, 1]} : vector<8x16xf32> to vector<8x8xf32>
      %174 = vector.extract_strided_slice %172 {offsets = [0, 8], sizes = [8, 8], strides = [1, 1]} : vector<8x16xf32> to vector<8x8xf32>
      %cst_67 = arith.constant -2.000000e+01 : f32
      %cst_68 = arith.constant 2.000000e+00 : f32
      %175 = vector.broadcast %cst_67 : f32 to vector<8x8xf32>
      %176 = arith.maximumf %175, %174 : vector<8x8xf32>
      %177 = vector.broadcast %cst_68 : f32 to vector<8x8xf32>
      %178 = arith.minimumf %177, %176 : vector<8x8xf32>
      %179 = math.exp %178 : vector<8x8xf32>
      %c0_69 = arith.constant 0 : index
      %c0_70 = arith.constant 0 : index
      %180 = vector.load %arg3[%c0_69, %c0_70] : memref<8x8xf32, #tpu.memory_space<vmem>>, vector<8x8xf32>
      %181 = arith.mulf %179, %180 : vector<8x8xf32>
      %182 = arith.addf %173, %181 : vector<8x8xf32>
      %183 = arith.mulf %180, %180 : vector<8x8xf32>
      %cst_71 = arith.constant -5.000000e-01 : f32
      %184 = vector.broadcast %cst_71 : f32 to vector<8x8xf32>
      %185 = arith.mulf %184, %183 : vector<8x8xf32>
      %186 = arith.subf %185, %178 : vector<8x8xf32>
      %cst_72 = arith.constant dense<0.000000e+00> : vector<8xf32>
      %187 = vector.multi_reduction <add>, %186, %cst_72 [1] : vector<8x8xf32> to vector<8xf32>
      %188 = vector.shape_cast %187 : vector<8xf32> to vector<8x1xf32>
      %cst_73 = arith.constant 7.35150814 : f32
      %189 = vector.broadcast %cst_73 : f32 to vector<8x1xf32>
      %190 = arith.subf %188, %189 : vector<8x1xf32>
      %191 = vector.shape_cast %190 : vector<8x1xf32> to vector<8x1xf32>
      %192 = vector.broadcast %191 : vector<8x1xf32> to vector<8x8xf32>
      %cst_74 = arith.constant 0.000000e+00 : f32
      %193 = vector.broadcast %cst_74 : f32 to vector<8x96xf32>
      %194 = tpu.concatenate %182, %173, %179, %192, %193 in 1 : vector<8x8xf32>, vector<8x8xf32>, vector<8x8xf32>, vector<8x8xf32>, vector<8x96xf32> -> vector<8x128xf32>
      %c0_75 = arith.constant 0 : index
      %c0_76 = arith.constant 0 : index
      %195 = vector.load %arg15[%c0_75, %c0_76] : memref<8x128xf32, #tpu.memory_space<vmem>>, vector<8x128xf32>
      tpu.vector_store %arg15[%c0_75, %c0_76], %194 {strides = array<i32>} : memref<8x128xf32, #tpu.memory_space<vmem>>, vector<8x128xf32>,
    } else {
    }
    return
  }
  func.func @transform_0(%arg0: i32) -> (i32, i32) {
    %c0_i32 = arith.constant 0 : i32
    %c0_i32_0 = arith.constant 0 : i32
    return %arg0, %c0_i32 : i32, i32
  }
  func.func @transform_1(%arg0: i32) -> (i32, i32) {
    %c0_i32 = arith.constant 0 : i32
    %c0_i32_0 = arith.constant 0 : i32
    return %arg0, %c0_i32 : i32, i32
  }
  func.func @transform_2(%arg0: i32) -> (i32, i32) {
    %c0_i32 = arith.constant 0 : i32
    %c0_i32_0 = arith.constant 0 : i32
    %c0_i32_1 = arith.constant 0 : i32
    return %c0_i32, %c0_i32_0 : i32, i32
  }
  func.func @transform_3(%arg0: i32) -> (i32, i32) {
    %c0_i32 = arith.constant 0 : i32
    %c0_i32_0 = arith.constant 0 : i32
    %c0_i32_1 = arith.constant 0 : i32
    return %c0_i32, %c0_i32_0 : i32, i32
  }
  func.func @transform_4(%arg0: i32) -> (i32, i32) {
    %c0_i32 = arith.constant 0 : i32
    %c0_i32_0 = arith.constant 0 : i32
    %c0_i32_1 = arith.constant 0 : i32
    return %c0_i32, %c0_i32_0 : i32, i32
  }
  func.func @transform_5(%arg0: i32) -> (i32, i32) {
    %c0_i32 = arith.constant 0 : i32
    %c0_i32_0 = arith.constant 0 : i32
    %c0_i32_1 = arith.constant 0 : i32
    return %c0_i32, %c0_i32_0 : i32, i32
  }
  func.func @transform_6(%arg0: i32) -> (i32, i32) {
    %c0_i32 = arith.constant 0 : i32
    %c0_i32_0 = arith.constant 0 : i32
    %c0_i32_1 = arith.constant 0 : i32
    return %c0_i32, %c0_i32_0 : i32, i32
  }
  func.func @transform_7(%arg0: i32) -> (i32, i32) {
    %c0_i32 = arith.constant 0 : i32
    %c0_i32_0 = arith.constant 0 : i32
    %c0_i32_1 = arith.constant 0 : i32
    return %c0_i32, %c0_i32_0 : i32, i32
  }
  func.func @transform_8(%arg0: i32) -> (i32, i32) {
    %c0_i32 = arith.constant 0 : i32
    %c0_i32_0 = arith.constant 0 : i32
    %c0_i32_1 = arith.constant 0 : i32
    return %c0_i32, %c0_i32_0 : i32, i32
  }
  func.func @transform_9(%arg0: i32) -> (i32, i32) {
    %c0_i32 = arith.constant 0 : i32
    %c0_i32_0 = arith.constant 0 : i32
    %c0_i32_1 = arith.constant 0 : i32
    return %c0_i32, %c0_i32_0 : i32, i32
  }
  func.func @transform_10(%arg0: i32) -> (i32, i32) {
    %c0_i32 = arith.constant 0 : i32
    %c0_i32_0 = arith.constant 0 : i32
    %c0_i32_1 = arith.constant 0 : i32
    return %c0_i32, %c0_i32_0 : i32, i32
  }
  func.func @transform_11(%arg0: i32) -> (i32, i32) {
    %c0_i32 = arith.constant 0 : i32
    %c0_i32_0 = arith.constant 0 : i32
    %c0_i32_1 = arith.constant 0 : i32
    return %c0_i32, %c0_i32_0 : i32, i32
  }
  func.func @transform_12(%arg0: i32) -> i32 {
    %c0_i32 = arith.constant 0 : i32
    %c0_i32_0 = arith.constant 0 : i32
    return %c0_i32 : i32
  }
  func.func @transform_13(%arg0: i32) -> i32 {
    %c0_i32 = arith.constant 0 : i32
    %c0_i32_0 = arith.constant 0 : i32
    return %c0_i32 : i32
  }
  func.func @transform_14(%arg0: i32) -> (i32, i32) {
    %c0_i32 = arith.constant 0 : i32
    %c0_i32_0 = arith.constant 0 : i32
    %c0_i32_1 = arith.constant 0 : i32
    return %c0_i32, %c0_i32_0 : i32, i32
  }
}

</mosaic_0001>

<llo_original>
// kernel: tpu_custom_call.1
$region0: #{tpu_custom_call.1}
  #allocation0 [shape = 'u32[]', space=smem, size = 0x4, offset = 0x4, fixed_abs, tag = 'smem constant byte address 0x4 - core index']
  #allocation1 [shape = 'u32[144,128]{1,0:T(1,128)}', space=vmem, size = 0x12000, scoped, tag = 'internal scratch']
  #allocation2 [shape = 'f32[32,128]{1,0:T(8,128)}', space=vmem, size = 0x4000, scoped, tag = 'scratch operand']
  #allocation3 [shape = 'f32[32,1]{1,0:T(8,128)}', space=vmem, size = 0x4000, scoped, tag = 'scratch operand']
  #allocation4 [shape = 'f32[8,32]{1,0:T(8,128)}', space=vmem, size = 0x1000, scoped, tag = 'scratch operand']
  #allocation5 [shape = 'f32[8,32]{1,0:T(8,128)}', space=vmem, size = 0x1000, scoped, tag = 'scratch operand']
  #allocation6 [shape = 'f32[1]{0:T(128)S(6)}', space=smem, size = 0x200, scoped, tag = 'scoped memory for tpu_custom_call.1']
  #allocation7 [shape = 'f32[1]{0:T(128)S(6)}', space=smem, size = 0x200, scoped, tag = 'scoped memory for tpu_custom_call.1']
  %s0 = inlined_call_operand.vmem [shape: bf16[64,4], index: 0, kind: input, shape index: {}]
  %s1 = inlined_call_operand.vmem [shape: f32[64,1], index: 1, kind: input, shape index: {}]
  %s2 = inlined_call_operand.vmem [shape: f32[8,8], index: 2, kind: input, shape index: {}]
  %s3 = inlined_call_operand.vmem [shape: bf16[4,128], index: 3, kind: input, shape index: {}]
  %s4 = inlined_call_operand.vmem [shape: bf16[32,128], index: 4, kind: input, shape index: {}]
  %s5 = inlined_call_operand.vmem [shape: f32[1,128], index: 5, kind: input, shape index: {}]
  %s6 = inlined_call_operand.vmem [shape: bf16[32,32], index: 6, kind: input, shape index: {}]
  %s7 = inlined_call_operand.vmem [shape: f32[1,32], index: 7, kind: input, shape index: {}]
  %s8 = inlined_call_operand.vmem [shape: bf16[32,128], index: 8, kind: input, shape index: {}]
  %s9 = inlined_call_operand.vmem [shape: f32[1,128], index: 9, kind: input, shape index: {}]
  %s10 = inlined_call_operand.vmem [shape: bf16[32,16], index: 10, kind: input, shape index: {}]
  %s11 = inlined_call_operand.vmem [shape: f32[1,16], index: 11, kind: input, shape index: {}]
  %s12 = inlined_call_operand.<no memory space> [shape: f32[1], index: 12, kind: input, shape index: {}]
  %s13 = inlined_call_operand.<no memory space> [shape: f32[1], index: 13, kind: input, shape index: {}]
  %s14 = inlined_call_operand.hbm [shape: f32[8,128], index: 14, kind: output, shape index: {}]
  %s15 = sld [smem:[#allocation0]]
  $region97: #{tpu_custom_call.1} parent=0
    _
  %s17 = ssub.s32 1, %s15
  %s18 = scalar_select 0, %s17, %s15
  %19 = sst [smem:[#allocation6]] %s12
  %20 = sst [smem:[#allocation7]] %s13
  $region1: #{tpu_custom_call.1} parent=0
    #allocation8 [shape = 'u8[4096]{0}', space=vmem, size = 0x1000, scoped, tag = 'output window, operand 0, single buffered']
    #allocation9 [shape = 's32[2]{0}', space=sflag, size = 0x8, scoped, tag = 'scoped memory for tpu_custom_call.1']
    %21 = vsyncpa [#allocation9], 0
    loop: start=0, step=1, limit=4
    $region2: #{tpu_custom_call.1} parent=1 // loop_pre_header
      _
    $region3: #{tpu_custom_call.1} parent=1 // loop_header
      %s23 = sphi 0, %s27
      %p24 = scmp.ge.s32.totalorder %s23, 4
      %s33 = sphi 0, %s35
      %s36 = sphi 0, %s33
      %s37 = sphi 0, %s36
      %s53 = sphi 0, %s37
      %s59 = sphi 0, %s61
      %s62 = sphi 0, %s59
      %s63 = sphi 0, %s62
      %s79 = sphi 0, %s63
      %s83 = sphi 0, %s83
      %s85 = sphi 0, %s83
      %s86 = sphi 0, %s85
      %s100 = sphi 0, %s86
      %s104 = sphi 0, %s104
      %s106 = sphi 0, %s104
      %s107 = sphi 0, %s106
      %s121 = sphi 0, %s107
      %s125 = sphi 0, %s125
      %s127 = sphi 0, %s125
      %s128 = sphi 0, %s127
      %s142 = sphi 0, %s128
      %s146 = sphi 0, %s146
      %s148 = sphi 0, %s146
      %s149 = sphi 0, %s148
      %s163 = sphi 0, %s149
      %s167 = sphi 0, %s167
      %s169 = sphi 0, %s167
      %s170 = sphi 0, %s169
      %s184 = sphi 0, %s170
      %s188 = sphi 0, %s188
      %s190 = sphi 0, %s188
      %s191 = sphi 0, %s190
      %s205 = sphi 0, %s191
      %s209 = sphi 0, %s209
      %s211 = sphi 0, %s209
      %s212 = sphi 0, %s211
      %s226 = sphi 0, %s212
      %s230 = sphi 0, %s230
      %s232 = sphi 0, %s230
      %s233 = sphi 0, %s232
      %s247 = sphi 0, %s233
      %s251 = sphi 0, %s251
      %s253 = sphi 0, %s251
      %s254 = sphi 0, %s253
      %s268 = sphi 0, %s254
      %s272 = sphi 0, %s272
      %s274 = sphi 0, %s272
      %s275 = sphi 0, %s274
      %s289 = sphi 0, %s275
      %s293 = sphi 0, %s293
      %s295 = sphi 0, %s293
      %s296 = sphi 0, %s295
      %s310 = sphi 0, %s296
      %s314 = sphi 0, %s314
      %s316 = sphi 0, %s314
      %s317 = sphi 0, %s316
      %s331 = sphi 0, %s317
      %s335 = sphi 0, %s335
      %s337 = sphi 0, %s335
      %s338 = sphi 0, %s337
      %s352 = sphi 0, %s338
    $region4: #{tpu_custom_call.1} parent=1 // loop_header_branch
      %26 = sbr.rel (%p24) target = $region8
    $region5: #{tpu_custom_call.1} parent=1 // loop_body
      %s28 = ssub.s32 %s23, 1
      %s29 = ssub.s32 %s23, 2
      %s30 = sadd.s32 %s23, 1
      %s31 = ssub.s32 %s23, %s30
      %p32 = scmp.eq.s32.totalorder %s31, 0
      %s34 = sadd.s32 %s33, 1
      %s35 = scalar_select %p32, %s33, %s34
      %p38 = pneg %p32
      %p39 = scmp.eq.s32.totalorder %s23, 1
      %p40 = por %p38, %p39
      %p41 = scmp.ne.s32.totalorder %s33, %s36
      %p42 = scmp.eq.s32.totalorder %s23, 0
      %p43 = por %p41, %p42
      %p44 = scmp.ne.s32.totalorder %s33, %s36
      %p45 = scmp.eq.s32.totalorder %s28, 1
      %p46 = por %p44, %p45
      %p47 = scmp.ne.s32.totalorder %s36, %s37
      %p48 = scmp.eq.s32.totalorder %s28, 0
      %p49 = por %p47, %p48
      %p50 = scmp.ne.s32.totalorder %s36, %s37
      %p51 = scmp.eq.s32.totalorder %s29, 1
      %p52 = por %p50, %p51
      %p54 = scmp.ne.s32.totalorder %s37, %s53
      %p55 = scmp.eq.s32.totalorder %s29, 0
      %p56 = por %p54, %p55
      %s57 = ssub.s32 %s23, %s30
      %p58 = scmp.eq.s32.totalorder %s57, 0
      %s60 = sadd.s32 %s59, 1
      %s61 = scalar_select %p58, %s59, %s60
      %p64 = pneg %p58
      %p65 = scmp.eq.s32.totalorder %s23, 1
      %p66 = por %p64, %p65
      %p67 = scmp.ne.s32.totalorder %s59, %s62
      %p68 = scmp.eq.s32.totalorder %s23, 0
      %p69 = por %p67, %p68
      %p70 = scmp.ne.s32.totalorder %s59, %s62
      %p71 = scmp.eq.s32.totalorder %s28, 1
      %p72 = por %p70, %p71
      %p73 = scmp.ne.s32.totalorder %s62, %s63
      %p74 = scmp.eq.s32.totalorder %s28, 0
      %p75 = por %p73, %p74
      %p76 = scmp.ne.s32.totalorder %s62, %s63
      %p77 = scmp.eq.s32.totalorder %s29, 1
      %p78 = por %p76, %p77
      %p80 = scmp.ne.s32.totalorder %s63, %s79
      %p81 = scmp.eq.s32.totalorder %s29, 0
      %p82 = por %p80, %p81
      %s84 = sadd.s32 %s83, 1
      %p87 = scmp.eq.s32.totalorder %s23, 1
      %p88 = scmp.ne.s32.totalorder %s83, %s85
      %p89 = scmp.eq.s32.totalorder %s23, 0
      %p90 = por %p88, %p89
      %p91 = scmp.ne.s32.totalorder %s83, %s85
      %p92 = scmp.eq.s32.totalorder %s28, 1
      %p93 = por %p91, %p92
      %p94 = scmp.ne.s32.totalorder %s85, %s86
      %p95 = scmp.eq.s32.totalorder %s28, 0
      %p96 = por %p94, %p95
      %p97 = scmp.ne.s32.totalorder %s85, %s86
      %p98 = scmp.eq.s32.totalorder %s29, 1
      %p99 = por %p97, %p98
      %p101 = scmp.ne.s32.totalorder %s86, %s100
      %p102 = scmp.eq.s32.totalorder %s29, 0
      %p103 = por %p101, %p102
      %s105 = sadd.s32 %s104, 1
      %p108 = scmp.eq.s32.totalorder %s23, 1
      %p109 = scmp.ne.s32.totalorder %s104, %s106
      %p110 = scmp.eq.s32.totalorder %s23, 0
      %p111 = por %p109, %p110
      %p112 = scmp.ne.s32.totalorder %s104, %s106
      %p113 = scmp.eq.s32.totalorder %s28, 1
      %p114 = por %p112, %p113
      %p115 = scmp.ne.s32.totalorder %s106, %s107
      %p116 = scmp.eq.s32.totalorder %s28, 0
      %p117 = por %p115, %p116
      %p118 = scmp.ne.s32.totalorder %s106, %s107
      %p119 = scmp.eq.s32.totalorder %s29, 1
      %p120 = por %p118, %p119
      %p122 = scmp.ne.s32.totalorder %s107, %s121
      %p123 = scmp.eq.s32.totalorder %s29, 0
      %p124 = por %p122, %p123
      %s126 = sadd.s32 %s125, 1
      %p129 = scmp.eq.s32.totalorder %s23, 1
      %p130 = scmp.ne.s32.totalorder %s125, %s127
      %p131 = scmp.eq.s32.totalorder %s23, 0
      %p132 = por %p130, %p131
      %p133 = scmp.ne.s32.totalorder %s125, %s127
      %p134 = scmp.eq.s32.totalorder %s28, 1
      %p135 = por %p133, %p134
      %p136 = scmp.ne.s32.totalorder %s127, %s128
      %p137 = scmp.eq.s32.totalorder %s28, 0
      %p138 = por %p136, %p137
      %p139 = scmp.ne.s32.totalorder %s127, %s128
      %p140 = scmp.eq.s32.totalorder %s29, 1
      %p141 = por %p139, %p140
      %p143 = scmp.ne.s32.totalorder %s128, %s142
      %p144 = scmp.eq.s32.totalorder %s29, 0
      %p145 = por %p143, %p144
      %s147 = sadd.s32 %s146, 1
      %p150 = scmp.eq.s32.totalorder %s23, 1
      %p151 = scmp.ne.s32.totalorder %s146, %s148
      %p152 = scmp.eq.s32.totalorder %s23, 0
      %p153 = por %p151, %p152
      %p154 = scmp.ne.s32.totalorder %s146, %s148
      %p155 = scmp.eq.s32.totalorder %s28, 1
      %p156 = por %p154, %p155
      %p157 = scmp.ne.s32.totalorder %s148, %s149
      %p158 = scmp.eq.s32.totalorder %s28, 0
      %p159 = por %p157, %p158
      %p160 = scmp.ne.s32.totalorder %s148, %s149
      %p161 = scmp.eq.s32.totalorder %s29, 1
      %p162 = por %p160, %p161
      %p164 = scmp.ne.s32.totalorder %s149, %s163
      %p165 = scmp.eq.s32.totalorder %s29, 0
      %p166 = por %p164, %p165
      %s168 = sadd.s32 %s167, 1
      %p171 = scmp.eq.s32.totalorder %s23, 1
      %p172 = scmp.ne.s32.totalorder %s167, %s169
      %p173 = scmp.eq.s32.totalorder %s23, 0
      %p174 = por %p172, %p173
      %p175 = scmp.ne.s32.totalorder %s167, %s169
      %p176 = scmp.eq.s32.totalorder %s28, 1
      %p177 = por %p175, %p176
      %p178 = scmp.ne.s32.totalorder %s169, %s170
      %p179 = scmp.eq.s32.totalorder %s28, 0
      %p180 = por %p178, %p179
      %p181 = scmp.ne.s32.totalorder %s169, %s170
      %p182 = scmp.eq.s32.totalorder %s29, 1
      %p183 = por %p181, %p182
      %p185 = scmp.ne.s32.totalorder %s170, %s184
      %p186 = scmp.eq.s32.totalorder %s29, 0
      %p187 = por %p185, %p186
      %s189 = sadd.s32 %s188, 1
      %p192 = scmp.eq.s32.totalorder %s23, 1
      %p193 = scmp.ne.s32.totalorder %s188, %s190
      %p194 = scmp.eq.s32.totalorder %s23, 0
      %p195 = por %p193, %p194
      %p196 = scmp.ne.s32.totalorder %s188, %s190
      %p197 = scmp.eq.s32.totalorder %s28, 1
      %p198 = por %p196, %p197
      %p199 = scmp.ne.s32.totalorder %s190, %s191
      %p200 = scmp.eq.s32.totalorder %s28, 0
      %p201 = por %p199, %p200
      %p202 = scmp.ne.s32.totalorder %s190, %s191
      %p203 = scmp.eq.s32.totalorder %s29, 1
      %p204 = por %p202, %p203
      %p206 = scmp.ne.s32.totalorder %s191, %s205
      %p207 = scmp.eq.s32.totalorder %s29, 0
      %p208 = por %p206, %p207
      %s210 = sadd.s32 %s209, 1
      %p213 = scmp.eq.s32.totalorder %s23, 1
      %p214 = scmp.ne.s32.totalorder %s209, %s211
      %p215 = scmp.eq.s32.totalorder %s23, 0
      %p216 = por %p214, %p215
      %p217 = scmp.ne.s32.totalorder %s209, %s211
      %p218 = scmp.eq.s32.totalorder %s28, 1
      %p219 = por %p217, %p218
      %p220 = scmp.ne.s32.totalorder %s211, %s212
      %p221 = scmp.eq.s32.totalorder %s28, 0
      %p222 = por %p220, %p221
      %p223 = scmp.ne.s32.totalorder %s211, %s212
      %p224 = scmp.eq.s32.totalorder %s29, 1
      %p225 = por %p223, %p224
      %p227 = scmp.ne.s32.totalorder %s212, %s226
      %p228 = scmp.eq.s32.totalorder %s29, 0
      %p229 = por %p227, %p228
      %s231 = sadd.s32 %s230, 1
      %p234 = scmp.eq.s32.totalorder %s23, 1
      %p235 = scmp.ne.s32.totalorder %s230, %s232
      %p236 = scmp.eq.s32.totalorder %s23, 0
      %p237 = por %p235, %p236
      %p238 = scmp.ne.s32.totalorder %s230, %s232
      %p239 = scmp.eq.s32.totalorder %s28, 1
      %p240 = por %p238, %p239
      %p241 = scmp.ne.s32.totalorder %s232, %s233
      %p242 = scmp.eq.s32.totalorder %s28, 0
      %p243 = por %p241, %p242
      %p244 = scmp.ne.s32.totalorder %s232, %s233
      %p245 = scmp.eq.s32.totalorder %s29, 1
      %p246 = por %p244, %p245
      %p248 = scmp.ne.s32.totalorder %s233, %s247
      %p249 = scmp.eq.s32.totalorder %s29, 0
      %p250 = por %p248, %p249
      %s252 = sadd.s32 %s251, 1
      %p255 = scmp.eq.s32.totalorder %s23, 1
      %p256 = scmp.ne.s32.totalorder %s251, %s253
      %p257 = scmp.eq.s32.totalorder %s23, 0
      %p258 = por %p256, %p257
      %p259 = scmp.ne.s32.totalorder %s251, %s253
      %p260 = scmp.eq.s32.totalorder %s28, 1
      %p261 = por %p259, %p260
      %p262 = scmp.ne.s32.totalorder %s253, %s254
      %p263 = scmp.eq.s32.totalorder %s28, 0
      %p264 = por %p262, %p263
      %p265 = scmp.ne.s32.totalorder %s253, %s254
      %p266 = scmp.eq.s32.totalorder %s29, 1
      %p267 = por %p265, %p266
      %p269 = scmp.ne.s32.totalorder %s254, %s268
      %p270 = scmp.eq.s32.totalorder %s29, 0
      %p271 = por %p269, %p270
      %s273 = sadd.s32 %s272, 1
      %p276 = scmp.eq.s32.totalorder %s23, 1
      %p277 = scmp.ne.s32.totalorder %s272, %s274
      %p278 = scmp.eq.s32.totalorder %s23, 0
      %p279 = por %p277, %p278
      %p280 = scmp.ne.s32.totalorder %s272, %s274
      %p281 = scmp.eq.s32.totalorder %s28, 1
      %p282 = por %p280, %p281
      %p283 = scmp.ne.s32.totalorder %s274, %s275
      %p284 = scmp.eq.s32.totalorder %s28, 0
      %p285 = por %p283, %p284
      %p286 = scmp.ne.s32.totalorder %s274, %s275
      %p287 = scmp.eq.s32.totalorder %s29, 1
      %p288 = por %p286, %p287
      %p290 = scmp.ne.s32.totalorder %s275, %s289
      %p291 = scmp.eq.s32.totalorder %s29, 0
      %p292 = por %p290, %p291
      %s294 = sadd.s32 %s293, 1
      %p297 = scmp.eq.s32.totalorder %s23, 1
      %p298 = scmp.ne.s32.totalorder %s293, %s295
      %p299 = scmp.eq.s32.totalorder %s23, 0
      %p300 = por %p298, %p299
      %p301 = scmp.ne.s32.totalorder %s293, %s295
      %p302 = scmp.eq.s32.totalorder %s28, 1
      %p303 = por %p301, %p302
      %p304 = scmp.ne.s32.totalorder %s295, %s296
      %p305 = scmp.eq.s32.totalorder %s28, 0
      %p306 = por %p304, %p305
      %p307 = scmp.ne.s32.totalorder %s295, %s296
      %p308 = scmp.eq.s32.totalorder %s29, 1
      %p309 = por %p307, %p308
      %p311 = scmp.ne.s32.totalorder %s296, %s310
      %p312 = scmp.eq.s32.totalorder %s29, 0
      %p313 = por %p311, %p312
      %s315 = sadd.s32 %s314, 1
      %p318 = scmp.eq.s32.totalorder %s23, 1
      %p319 = scmp.ne.s32.totalorder %s314, %s316
      %p320 = scmp.eq.s32.totalorder %s23, 0
      %p321 = por %p319, %p320
      %p322 = scmp.ne.s32.totalorder %s314, %s316
      %p323 = scmp.eq.s32.totalorder %s28, 1
      %p324 = por %p322, %p323
      %p325 = scmp.ne.s32.totalorder %s316, %s317
      %p326 = scmp.eq.s32.totalorder %s28, 0
      %p327 = por %p325, %p326
      %p328 = scmp.ne.s32.totalorder %s316, %s317
      %p329 = scmp.eq.s32.totalorder %s29, 1
      %p330 = por %p328, %p329
      %p332 = scmp.ne.s32.totalorder %s317, %s331
      %p333 = scmp.eq.s32.totalorder %s29, 0
      %p334 = por %p332, %p333
      %s336 = sadd.s32 %s335, 1
      %p339 = scmp.eq.s32.totalorder %s23, 1
      %p340 = scmp.ne.s32.totalorder %s335, %s337
      %p341 = scmp.eq.s32.totalorder %s23, 0
      %p342 = por %p340, %p341
      %p343 = scmp.ne.s32.totalorder %s335, %s337
      %p344 = scmp.eq.s32.totalorder %s28, 1
      %p345 = por %p343, %p344
      %p346 = scmp.ne.s32.totalorder %s337, %s338
      %p347 = scmp.eq.s32.totalorder %s28, 0
      %p348 = por %p346, %p347
      %p349 = scmp.ne.s32.totalorder %s337, %s338
      %p350 = scmp.eq.s32.totalorder %s29, 1
      %p351 = por %p349, %p350
      %p353 = scmp.ne.s32.totalorder %s338, %s352
      %p354 = scmp.eq.s32.totalorder %s29, 0
      %p355 = por %p353, %p354
      %p356 = scmp.le.s32.totalorder 1, %s23
      %p357 = scmp.lt.s32.totalorder %s23, 3
      %p358 = pnand %p356, %p357
      %p359 = pneg %p358
      // Predicated region
      $region9: #{tpu_custom_call.1} parent=5 // pred_check
        _
      $region10: #{tpu_custom_call.1} parent=5 // pred_check_branch
        %361 = sbr.rel (%p358) target = $region12
      $region11: #{tpu_custom_call.1} parent=5 // pred_region
        %s362 = ssub.s32 %s23, 1
        // Predicated region
        $region13: #{tpu_custom_call.1} parent=11 // pred_check
          %p363 = pneg %p96
        $region14: #{tpu_custom_call.1} parent=11 // pred_check_branch
          %365 = sbr.rel (%p363) target = $region16
        $region15: #{tpu_custom_call.1} parent=11 // pred_region
          _
        $region16: #{tpu_custom_call.1} parent=11 // pred_fallthru
          _
        // Predicated region
        $region17: #{tpu_custom_call.1} parent=11 // pred_check
          %p366 = pneg %p117
        $region18: #{tpu_custom_call.1} parent=11 // pred_check_branch
          %368 = sbr.rel (%p366) target = $region20
        $region19: #{tpu_custom_call.1} parent=11 // pred_region
          _
        $region20: #{tpu_custom_call.1} parent=11 // pred_fallthru
          _
        // Predicated region
        $region21: #{tpu_custom_call.1} parent=11 // pred_check
          %p369 = pneg %p138
        $region22: #{tpu_custom_call.1} parent=11 // pred_check_branch
          %371 = sbr.rel (%p369) target = $region24
        $region23: #{tpu_custom_call.1} parent=11 // pred_region
          _
        $region24: #{tpu_custom_call.1} parent=11 // pred_fallthru
          _
        // Predicated region
        $region25: #{tpu_custom_call.1} parent=11 // pred_check
          %p372 = pneg %p159
        $region26: #{tpu_custom_call.1} parent=11 // pred_check_branch
          %374 = sbr.rel (%p372) target = $region28
        $region27: #{tpu_custom_call.1} parent=11 // pred_region
          _
        $region28: #{tpu_custom_call.1} parent=11 // pred_fallthru
          _
        // Predicated region
        $region29: #{tpu_custom_call.1} parent=11 // pred_check
          %p375 = pneg %p180
        $region30: #{tpu_custom_call.1} parent=11 // pred_check_branch
          %377 = sbr.rel (%p375) target = $region32
        $region31: #{tpu_custom_call.1} parent=11 // pred_region
          _
        $region32: #{tpu_custom_call.1} parent=11 // pred_fallthru
          _
        // Predicated region
        $region33: #{tpu_custom_call.1} parent=11 // pred_check
          %p378 = pneg %p201
        $region34: #{tpu_custom_call.1} parent=11 // pred_check_branch
          %380 = sbr.rel (%p378) target = $region36
        $region35: #{tpu_custom_call.1} parent=11 // pred_region
          _
        $region36: #{tpu_custom_call.1} parent=11 // pred_fallthru
          _
        // Predicated region
        $region37: #{tpu_custom_call.1} parent=11 // pred_check
          %p381 = pneg %p222
        $region38: #{tpu_custom_call.1} parent=11 // pred_check_branch
          %383 = sbr.rel (%p381) target = $region40
        $region39: #{tpu_custom_call.1} parent=11 // pred_region
          _
        $region40: #{tpu_custom_call.1} parent=11 // pred_fallthru
          _
        // Predicated region
        $region41: #{tpu_custom_call.1} parent=11 // pred_check
          %p384 = pneg %p243
        $region42: #{tpu_custom_call.1} parent=11 // pred_check_branch
          %386 = sbr.rel (%p384) target = $region44
        $region43: #{tpu_custom_call.1} parent=11 // pred_region
          _
        $region44: #{tpu_custom_call.1} parent=11 // pred_fallthru
          _
        // Predicated region
        $region45: #{tpu_custom_call.1} parent=11 // pred_check
          %p387 = pneg %p264
        $region46: #{tpu_custom_call.1} parent=11 // pred_check_branch
          %389 = sbr.rel (%p387) target = $region48
        $region47: #{tpu_custom_call.1} parent=11 // pred_region
          _
        $region48: #{tpu_custom_call.1} parent=11 // pred_fallthru
          _
        // Predicated region
        $region49: #{tpu_custom_call.1} parent=11 // pred_check
          %p390 = pneg %p285
        $region50: #{tpu_custom_call.1} parent=11 // pred_check_branch
          %392 = sbr.rel (%p390) target = $region52
        $region51: #{tpu_custom_call.1} parent=11 // pred_region
          _
        $region52: #{tpu_custom_call.1} parent=11 // pred_fallthru
          _
        // Predicated region
        $region53: #{tpu_custom_call.1} parent=11 // pred_check
          %p393 = pneg %p306
        $region54: #{tpu_custom_call.1} parent=11 // pred_check_branch
          %395 = sbr.rel (%p393) target = $region56
        $region55: #{tpu_custom_call.1} parent=11 // pred_region
          _
        $region56: #{tpu_custom_call.1} parent=11 // pred_fallthru
          _
        // Predicated region
        $region57: #{tpu_custom_call.1} parent=11 // pred_check
          %p396 = pneg %p327
        $region58: #{tpu_custom_call.1} parent=11 // pred_check_branch
          %398 = sbr.rel (%p396) target = $region60
        $region59: #{tpu_custom_call.1} parent=11 // pred_region
          _
        $region60: #{tpu_custom_call.1} parent=11 // pred_fallthru
          _
      $region12: #{tpu_custom_call.1} parent=5 // pred_fallthru
        _
      %p399 = scmp.lt.s32.totalorder %s23, 2
      // Predicated region
      $region61: #{tpu_custom_call.1} parent=5 // pred_check
        %p400 = pneg %p399
      $region62: #{tpu_custom_call.1} parent=5 // pred_check_branch
        %402 = sbr.rel (%p400) target = $region64
      $region63: #{tpu_custom_call.1} parent=5 // pred_region
        // Predicated region
        $region65: #{tpu_custom_call.1} parent=63 // pred_check
          %p403 = pneg %p43
        $region66: #{tpu_custom_call.1} parent=63 // pred_check_branch
          %405 = sbr.rel (%p403) target = $region68
        $region67: #{tpu_custom_call.1} parent=63 // pred_region
          %s406 = smul.u32 4, %s23
          %p407 = scmp.lt.s32.totalorder %s406, 7
          %s408 = scalar_select %p407, %s406, 7
          %s409 = smul.addr %s408, 4
          %s410 = scalar_lea.vmem %s0, %s409
          %s411 = smul.u32 4, %s23
        $region68: #{tpu_custom_call.1} parent=63 // pred_fallthru
          _
        // Predicated region
        $region69: #{tpu_custom_call.1} parent=63 // pred_check
          %p412 = pneg %p69
        $region70: #{tpu_custom_call.1} parent=63 // pred_check_branch
          %414 = sbr.rel (%p412) target = $region72
        $region71: #{tpu_custom_call.1} parent=63 // pred_region
          %s415 = smul.u32 4, %s23
          %p416 = scmp.lt.s32.totalorder %s415, 7
          %s417 = scalar_select %p416, %s415, 7
          %s418 = smul.addr %s417, 8
          %s419 = scalar_lea.vmem %s1, %s418
          %s420 = smul.u32 4, %s23
        $region72: #{tpu_custom_call.1} parent=63 // pred_fallthru
          _
      $region64: #{tpu_custom_call.1} parent=5 // pred_fallthru
        _
      %p421 = scmp.le.s32.totalorder 1, %s23
      %p422 = scmp.lt.s32.totalorder %s23, 3
      %p423 = pnand %p421, %p422
      %p424 = pneg %p423
      // Predicated region
      $region73: #{tpu_custom_call.1} parent=5 // pred_check
        _
      $region74: #{tpu_custom_call.1} parent=5 // pred_check_branch
        %426 = sbr.rel (%p423) target = $region76
      $region75: #{tpu_custom_call.1} parent=5 // pred_region
        %s427 = ssub.s32 %s23, 1
        %s428 = smul.u32 4, %s28
        %p429 = scmp.lt.s32.totalorder %s428, 7
        %s430 = scalar_select %p429, %s428, 7
        %s431 = smul.addr %s430, 4
        %s432 = scalar_lea.vmem %s0, %s431
        %p433 = pneg %p49
        %p434 = pneg %p46
        %s435 = smul.u32 4, %s28
        %p436 = scmp.lt.s32.totalorder %s435, 7
        %s437 = scalar_select %p436, %s435, 7
        %s438 = smul.addr %s437, 8
        %s439 = scalar_lea.vmem %s1, %s438
        %p440 = pneg %p75
        %p441 = pneg %p72
        %p442 = pneg %p96
        %p443 = pneg %p93
        %p444 = pneg %p117
        %p445 = pneg %p114
        %p446 = pneg %p138
        %p447 = pneg %p135
        %p448 = pneg %p159
        %p449 = pneg %p156
        %p450 = pneg %p180
        %p451 = pneg %p177
        %p452 = pneg %p201
        %p453 = pneg %p198
        %p454 = pneg %p222
        %p455 = pneg %p219
        %p456 = pneg %p243
        %p457 = pneg %p240
        %p458 = pneg %p264
        %p459 = pneg %p261
        %p460 = pneg %p285
        %p461 = pneg %p282
        %p462 = pneg %p306
        %p463 = pneg %p303
        %p464 = pneg %p327
        %p465 = pneg %p324
        %p466 = pneg %p348
        %p467 = pneg %p345
        %s468 = smul.u32 4, %s28
        %p469 = scmp.lt.s32.totalorder %s468, 7
        %s470 = scalar_select %p469, %s468, 7
        %s471 = smul.addr %s470, 4
        %s472 = scalar_lea.vmem %s0, %s471
        %s473 = smul.u32 4, %s28
        %s474 = smul.u32 4, %s28
        %p475 = scmp.lt.s32.totalorder %s474, 7
        %s476 = scalar_select %p475, %s474, 7
        %s477 = smul.addr %s476, 8
        %s478 = scalar_lea.vmem %s1, %s477
        %s479 = smul.u32 4, %s28
        %p481 = scmp.eq.s32.totalorder %s28, 0
        // Predicated region
        $region77: #{tpu_custom_call.1} parent=75 // pred_check
          %p482 = pneg %p481
        $region78: #{tpu_custom_call.1} parent=75 // pred_check_branch
          %484 = sbr.rel (%p482) target = $region80
        $region79: #{tpu_custom_call.1} parent=75 // pred_region
          %vm485 = vcmask 261120
          %486 = vst.msk [vmem:[#allocation4] sm:$0xff] %vm485, 0.0
          %487 = vst.msk [vmem:[#allocation5] sm:$0xff] %vm485, 0.0
        $region80: #{tpu_custom_call.1} parent=75 // pred_fallthru
          _
        %v488 = vld [vmem:[%s4] sm:$0xf]
        %v489 = vld [vmem:[%s4 + $0x4] sm:$0xf]
        %v490 = vld [vmem:[%s4 + $0x8] sm:$0xf]
        %v491 = vld [vmem:[%s4 + $0xc] sm:$0xf]
        %v492 = vld [vmem:[%s6] sm:$0xf]
        %v493 = vld [vmem:[%s6 + $0x4] sm:$0xf]
        %v494 = vld [vmem:[%s6 + $0x8] sm:$0xf]
        %v495 = vld [vmem:[%s6 + $0xc] sm:$0xf]
        %v496 = vld [vmem:[%s7] sm:$0x1]
        %v497 = vld [vmem:[%s8] sm:$0xf]
        %v498 = vld [vmem:[%s8 + $0x4] sm:$0xf]
        %v499 = vld [vmem:[%s8 + $0x8] sm:$0xf]
        %v500 = vld [vmem:[%s8 + $0xc] sm:$0xf]
        %s501 = sld [smem:[#allocation6]]
        %s502 = sld [smem:[#allocation7]]
        %v503 = vld [vmem:[%s478] sm:$0xff]
        %v504 = vld [vmem:[%s478 + $0x8] sm:$0xff]
        %v505 = vld [vmem:[%s478 + $0x10] sm:$0xff]
        %v506 = vld [vmem:[%s478 + $0x18] sm:$0xff]
        %v507 = vstv %s501
        %v508 = vmul.f32 %v503, %v507
        %v509 = vmul.f32 %v504, %v507
        %v510 = vmul.f32 %v505, %v507
        %v511 = vmul.f32 %v506, %v507
        %v512 = vstv %s502
        %v513 = vadd.f32 %v508, %v512
        %v514 = vadd.f32 %v509, %v512
        %v515 = vadd.f32 %v510, %v512
        %v516 = vadd.f32 %v511, %v512
        %v517 = vtanh.pop %v513
        %v518 = vtanh.pop %v514
        %v519 = vtanh.pop %v515
        %v520 = vtanh.pop %v516
        %vm521 = vcmask 7168
        %522 = vst.msk [vmem:[#allocation3] sm:$0xff] %vm521, %v517
        %523 = vst.msk [vmem:[#allocation3 + $0x8] sm:$0xff] %vm521, %v518
        %524 = vst.msk [vmem:[#allocation3 + $0x10] sm:$0xff] %vm521, %v519
        %525 = vst.msk [vmem:[#allocation3 + $0x18] sm:$0xff] %vm521, %v520
        %v526 = vld [vmem:[%s472] sm:$0xf]
        %v527 = vld [vmem:[%s472 + $0x4] sm:$0xf]
        %v528 = vld [vmem:[%s472 + $0x8] sm:$0xf]
        %v529 = vld [vmem:[%s472 + $0xc] sm:$0xf]
        %v530 = vld [vmem:[%s3] sm:$0x3]
        %v531 = vld [vmem:[%s5] sm:$0x1]
        %v533 = vlaneseq
        %v534 = vshrl.u32 %v533, 7
        %v535 = vsub.s32 0, %v534
        %v536 = vrot.slane %v531, %v535
        %v542 = vunpack.c.l.b16 %v526
        %v543 = vunpack.c.l.b16 %v527
        %v544 = vunpack.c.l.b16 %v528
        %v545 = vunpack.c.l.b16 %v529
        %v546 = vpack.c.b16 %v543, %v542
        %v547 = vpack.c.b16 %v545, %v544
        %vm548 = vcmask 31744
        %v550 = vsel %vm548, %v546, 0
        %v553 = vsel %vm548, %v547, 0
        %vm555 = vcmask 1041408
        %v557 = vsel %vm555, %v530, 0
        %559 = vmatprep.subr.bf16.mxu0 0
        %560 = vmatpush1.bf16.msra.mxu0 %v557
        %561 = vmatprep.subr.bf16.mxu0 0
        %562 = vmatpush1.bf16.msra.mxu0 0
        %563 = vmatprep.subr.bf16.mxu0 0
        %564 = vmatpush1.bf16.msra.mxu0 0
        %565 = vmatprep.subr.bf16.mxu0 0
        %566 = vmatpush1.bf16.msra.mxu0 0
        %567 = vmatprep.subr.bf16.mxu0 0
        %568 = vmatpush1.bf16.msra.mxu0 0
        %569 = vmatprep.subr.bf16.mxu0 0
        %570 = vmatpush1.bf16.msra.mxu0 0
        %571 = vmatprep.subr.bf16.mxu0 0
        %572 = vmatpush1.bf16.msra.mxu0 0
        %573 = vmatprep.subr.bf16.mxu0 0
        %574 = vmatpush1.bf16.msra.mxu0 0
        %575 = vmatprep.subr.bf16.mxu0 0
        %576 = vmatpush1.bf16.msra.mxu0 0
        %577 = vmatprep.subr.bf16.mxu0 0
        %578 = vmatpush1.bf16.msra.mxu0 0
        %579 = vmatprep.subr.bf16.mxu0 0
        %580 = vmatpush1.bf16.msra.mxu0 0
        %581 = vmatprep.subr.bf16.mxu0 0
        %582 = vmatpush1.bf16.msra.mxu0 0
        %583 = vmatprep.subr.bf16.mxu0 0
        %584 = vmatpush1.bf16.msra.mxu0 0
        %585 = vmatprep.subr.bf16.mxu0 0
        %586 = vmatpush1.bf16.msra.mxu0 0
        %587 = vmatprep.subr.bf16.mxu0 0
        %588 = vmatpush1.bf16.msra.mxu0 0
        %589 = vmatprep.subr.bf16.mxu0 0
        %590 = vmatpush1.bf16.msra.mxu0 0
        %591 = vmatprep.mubr.bf16.mxu0 0
        %592 = vmatmul.mubr.bf16.gmra.mrb[0].mxu0 %v550
        %v593 = vpop.f32.mrb[0].mxu0
        %v594 = vadd.f32 %v536, %v593
        %v595 = vpop.f32.mrb[0].mxu0
        %v596 = vpop.f32.mrb[0].mxu0
        %v597 = vadd.f32 %v536, %v596
        %v598 = vpop.f32.mrb[0].mxu0
        %599 = vmatprep.mubr.bf16.mxu0 0
        %600 = vmatmul.mubr.bf16.gmra.mrb[0].mxu0 %v553
        %v601 = vpop.f32.mrb[0].mxu0
        %v602 = vadd.f32 %v536, %v601
        %v603 = vpop.f32.mrb[0].mxu0
        %v604 = vpop.f32.mrb[0].mxu0
        %v605 = vadd.f32 %v536, %v604
        %v606 = vpop.f32.mrb[0].mxu0
        %607 = vdwg.mxu0
        %v608 = vld [vmem:[%s9] sm:$0x1]
        %610 = vset.pattern.permute.xlu0 0
        %611 = vperm.xlu0 %610, %v517
        %v612 = vpop.permute.xlu0 %611
        %615 = vset.pattern.permute.xlu0 0
        %616 = vperm.xlu0 %615, %v518
        %v617 = vpop.permute.xlu0 %616
        %620 = vset.pattern.permute.xlu0 0
        %621 = vperm.xlu0 %620, %v519
        %v622 = vpop.permute.xlu0 %621
        %625 = vset.pattern.permute.xlu0 0
        %626 = vperm.xlu0 %625, %v520
        %v627 = vpop.permute.xlu0 %626
        %v630 = vlaneseq
        %v631 = vshrl.u32 %v630, 7
        %v632 = vsub.s32 0, %v631
        %v633 = vrot.slane %v608, %v632
        %v635 = vmul.f32 %v612, %v633
        %v636 = vmul.f32 %v617, %v633
        %v637 = vmul.f32 %v622, %v633
        %v638 = vmul.f32 %v627, %v633
        %v639 = vadd.f32 %v594, %v635
        %v640 = vadd.f32 %v597, %v636
        %v641 = vadd.f32 %v602, %v637
        %v642 = vadd.f32 %v605, %v638
        %643 = vst [vmem:[#allocation2] sm:$0xff] %v639
        %644 = vst [vmem:[#allocation2 + $0x8] sm:$0xff] %v640
        %645 = vst [vmem:[#allocation2 + $0x10] sm:$0xff] %v641
        %646 = vst [vmem:[#allocation2 + $0x18] sm:$0xff] %v642
        %v647 = vld [vmem:[#allocation4] sm:$0xff]
        %v648 = vld [vmem:[#allocation5] sm:$0xff]
        %v649 = vld [vmem:[#allocation2] sm:$0xff]
        %v650 = vld [vmem:[#allocation3] sm:$0xff]
        %v651 = vpack.c.bf16 %v647, %v647
        %v653 = vlaneseq
        %v654 = vshrl.u32 %v653, 7
        %v655 = vsub.s32 0, %v654
        %v656 = vrot.slane %v496, %v655
        %v662 = vunpack.c.l.b16 %v492
        %v663 = vunpack.c.l.b16 %v493
        %v664 = vunpack.c.l.b16 %v494
        %v665 = vunpack.c.l.b16 %v495
        %v666 = vpack.c.b16 %v663, %v662
        %v667 = vpack.c.b16 %v665, %v664
        %vm670 = vcmask 261120
        %v672 = vsel %vm670, %v651, 0
        %674 = vmatprep.subr.bf16.mxu0 0
        %675 = vmatpush1.bf16.msra.mxu0 %v666
        %676 = vmatprep.subr.bf16.mxu0 0
        %677 = vmatpush1.bf16.msra.mxu0 %v667
        %678 = vmatprep.subr.bf16.mxu0 0
        %679 = vmatpush1.bf16.msra.mxu0 0
        %680 = vmatprep.subr.bf16.mxu0 0
        %681 = vmatpush1.bf16.msra.mxu0 0
        %682 = vmatprep.subr.bf16.mxu0 0
        %683 = vmatpush1.bf16.msra.mxu0 0
        %684 = vmatprep.subr.bf16.mxu0 0
        %685 = vmatpush1.bf16.msra.mxu0 0
        %686 = vmatprep.subr.bf16.mxu0 0
        %687 = vmatpush1.bf16.msra.mxu0 0
        %688 = vmatprep.subr.bf16.mxu0 0
        %689 = vmatpush1.bf16.msra.mxu0 0
        %690 = vmatprep.subr.bf16.mxu0 0
        %691 = vmatpush1.bf16.msra.mxu0 0
        %692 = vmatprep.subr.bf16.mxu0 0
        %693 = vmatpush1.bf16.msra.mxu0 0
        %694 = vmatprep.subr.bf16.mxu0 0
        %695 = vmatpush1.bf16.msra.mxu0 0
        %696 = vmatprep.subr.bf16.mxu0 0
        %697 = vmatpush1.bf16.msra.mxu0 0
        %698 = vmatprep.subr.bf16.mxu0 0
        %699 = vmatpush1.bf16.msra.mxu0 0
        %700 = vmatprep.subr.bf16.mxu0 0
        %701 = vmatpush1.bf16.msra.mxu0 0
        %702 = vmatprep.subr.bf16.mxu0 0
        %703 = vmatpush1.bf16.msra.mxu0 0
        %704 = vmatprep.subr.bf16.mxu0 0
        %705 = vmatpush1.bf16.msra.mxu0 0
        %706 = vmatprep.mubr.bf16.mxu0 0
        %707 = vmatmul.mubr.bf16.gmra.mrb[0].mxu0 %v672
        %v708 = vpop.f32.mrb[0].mxu0
        %v709 = vadd.f32 %v656, %v708
        %v710 = vpop.f32.mrb[0].mxu0
        %v711 = vpop.f32.mrb[0].mxu0
        %v712 = vpop.f32.mrb[0].mxu0
        %713 = vdwg.mxu0
        %v714 = vtanh.pop %v709
        %716 = vset.pattern.permute.xlu0 0
        %717 = vperm.xlu0 %716, %v650
        %v718 = vpop.permute.xlu0 %717
        %v720 = vmul.f32 %v718, %v714
        %v725 = vunpack.c.l.b16 %v488
        %v726 = vunpack.c.l.b16 %v489
        %v727 = vunpack.c.l.b16 %v490
        %v728 = vunpack.c.l.b16 %v491
        %v729 = vpack.c.b16 %v726, %v725
        %v730 = vpack.c.b16 %v728, %v727
        %733 = vmatprep.subr.bf16.mxu0 0
        %734 = vmatpush1.bf16.msra.mxu0 %v729
        %735 = vmatprep.subr.bf16.mxu0 0
        %736 = vmatpush1.bf16.msra.mxu0 %v730
        %737 = vmatprep.subr.bf16.mxu0 0
        %738 = vmatpush1.bf16.msra.mxu0 0
        %739 = vmatprep.subr.bf16.mxu0 0
        %740 = vmatpush1.bf16.msra.mxu0 0
        %741 = vmatprep.subr.bf16.mxu0 0
        %742 = vmatpush1.bf16.msra.mxu0 0
        %743 = vmatprep.subr.bf16.mxu0 0
        %744 = vmatpush1.bf16.msra.mxu0 0
        %745 = vmatprep.subr.bf16.mxu0 0
        %746 = vmatpush1.bf16.msra.mxu0 0
        %747 = vmatprep.subr.bf16.mxu0 0
        %748 = vmatpush1.bf16.msra.mxu0 0
        %749 = vmatprep.subr.bf16.mxu0 0
        %750 = vmatpush1.bf16.msra.mxu0 0
        %751 = vmatprep.subr.bf16.mxu0 0
        %752 = vmatpush1.bf16.msra.mxu0 0
        %753 = vmatprep.subr.bf16.mxu0 0
        %754 = vmatpush1.bf16.msra.mxu0 0
        %755 = vmatprep.subr.bf16.mxu0 0
        %756 = vmatpush1.bf16.msra.mxu0 0
        %757 = vmatprep.subr.bf16.mxu0 0
        %758 = vmatpush1.bf16.msra.mxu0 0
        %759 = vmatprep.subr.bf16.mxu0 0
        %760 = vmatpush1.bf16.msra.mxu0 0
        %761 = vmatprep.subr.bf16.mxu0 0
        %762 = vmatpush1.bf16.msra.mxu0 0
        %763 = vmatprep.subr.bf16.mxu0 0
        %764 = vmatpush1.bf16.msra.mxu0 0
        %765 = vmatprep.mubr.bf16.mxu0 0
        %766 = vmatmul.mubr.bf16.gmra.mrb[0].mxu0 %v672
        %v767 = vpop.f32.mrb[0].mxu0
        %v768 = vadd.f32 0.0, %v767
        %v769 = vpop.f32.mrb[0].mxu0
        %v770 = vpop.f32.mrb[0].mxu0
        %v771 = vpop.f32.mrb[0].mxu0
        %772 = vdwg.mxu0
        %v773 = vadd.f32 %v649, %v768
        %v774 = vpack.c.bf16 %v720, %v720
        %v779 = vunpack.c.l.b16 %v497
        %v780 = vunpack.c.l.b16 %v498
        %v781 = vunpack.c.l.b16 %v499
        %v782 = vunpack.c.l.b16 %v500
        %v783 = vpack.c.b16 %v780, %v779
        %v784 = vpack.c.b16 %v782, %v781
        %v788 = vsel %vm670, %v774, 0
        %790 = vmatprep.subr.bf16.mxu0 0
        %791 = vmatpush1.bf16.msra.mxu0 %v783
        %792 = vmatprep.subr.bf16.mxu0 0
        %793 = vmatpush1.bf16.msra.mxu0 %v784
        %794 = vmatprep.subr.bf16.mxu0 0
        %795 = vmatpush1.bf16.msra.mxu0 0
        %796 = vmatprep.subr.bf16.mxu0 0
        %797 = vmatpush1.bf16.msra.mxu0 0
        %798 = vmatprep.subr.bf16.mxu0 0
        %799 = vmatpush1.bf16.msra.mxu0 0
        %800 = vmatprep.subr.bf16.mxu0 0
        %801 = vmatpush1.bf16.msra.mxu0 0
        %802 = vmatprep.subr.bf16.mxu0 0
        %803 = vmatpush1.bf16.msra.mxu0 0
        %804 = vmatprep.subr.bf16.mxu0 0
        %805 = vmatpush1.bf16.msra.mxu0 0
        %806 = vmatprep.subr.bf16.mxu0 0
        %807 = vmatpush1.bf16.msra.mxu0 0
        %808 = vmatprep.subr.bf16.mxu0 0
        %809 = vmatpush1.bf16.msra.mxu0 0
        %810 = vmatprep.subr.bf16.mxu0 0
        %811 = vmatpush1.bf16.msra.mxu0 0
        %812 = vmatprep.subr.bf16.mxu0 0
        %813 = vmatpush1.bf16.msra.mxu0 0
        %814 = vmatprep.subr.bf16.mxu0 0
        %815 = vmatpush1.bf16.msra.mxu0 0
        %816 = vmatprep.subr.bf16.mxu0 0
        %817 = vmatpush1.bf16.msra.mxu0 0
        %818 = vmatprep.subr.bf16.mxu0 0
        %819 = vmatpush1.bf16.msra.mxu0 0
        %820 = vmatprep.subr.bf16.mxu0 0
        %821 = vmatpush1.bf16.msra.mxu0 0
        %822 = vmatprep.mubr.bf16.mxu0 0
        %823 = vmatmul.mubr.bf16.gmra.mrb[0].mxu0 %v788
        %v824 = vpop.f32.mrb[0].mxu0
        %v825 = vadd.f32 0.0, %v824
        %v826 = vpop.f32.mrb[0].mxu0
        %v827 = vpop.f32.mrb[0].mxu0
        %v828 = vpop.f32.mrb[0].mxu0
        %829 = vdwg.mxu0
        %v830 = vadd.f32 %v773, %v825
        %v831 = vxor.u32 %v830, 2147483648
        %v832 = vmul.f32 %v831, 1.442695
        %v833 = vpow.pop %v832
        %v834 = vadd.f32 %v833, 1.0
        %v835 = vrcp.pop %v834
        %v836 = vmul.f32 1.0, %v835
        %v837 = vtanh.pop %v830
        %839 = vrot.lane.b32.xlu0 %v648, 32
        %v840 = vpop.permute.xlu0 %839
        %v842 = vmul.f32 %v836, %v840
        %844 = vrot.lane.b32.xlu0 %v837, 64
        %v845 = vpop.permute.xlu0 %844
        %v847 = vmul.f32 %v836, %v845
        %849 = vrot.lane.b32.xlu0 %v847, 32
        %v850 = vpop.permute.xlu0 %849
        %v852 = vadd.f32 %v842, %v850
        %v853 = vtanh.pop %v852
        %855 = vrot.lane.b32.xlu0 %v853, 64
        %v856 = vpop.permute.xlu0 %855
        %v858 = vmul.f32 %v836, %v856
        %s859 = scalar_lea.vmem [#allocation2], 8
        %v860 = vld [vmem:[%s859] sm:$0xff]
        %s861 = scalar_lea.vmem [#allocation3], 8
        %v862 = vld [vmem:[%s861] sm:$0xff]
        %v863 = vpack.c.bf16 %v858, %v858
        %865 = vrot.lane.b32.xlu0 %v863, 32
        %v866 = vpop.permute.xlu0 %865
        %v868 = vsel %vm670, %v866, 0
        %870 = vmatprep.subr.bf16.mxu0 0
        %871 = vmatpush1.bf16.msra.mxu0 %v666
        %872 = vmatprep.subr.bf16.mxu0 0
        %873 = vmatpush1.bf16.msra.mxu0 %v667
        %874 = vmatprep.subr.bf16.mxu0 0
        %875 = vmatpush1.bf16.msra.mxu0 0
        %876 = vmatprep.subr.bf16.mxu0 0
        %877 = vmatpush1.bf16.msra.mxu0 0
        %878 = vmatprep.subr.bf16.mxu0 0
        %879 = vmatpush1.bf16.msra.mxu0 0
        %880 = vmatprep.subr.bf16.mxu0 0
        %881 = vmatpush1.bf16.msra.mxu0 0
        %882 = vmatprep.subr.bf16.mxu0 0
        %883 = vmatpush1.bf16.msra.mxu0 0
        %884 = vmatprep.subr.bf16.mxu0 0
        %885 = vmatpush1.bf16.msra.mxu0 0
        %886 = vmatprep.subr.bf16.mxu0 0
        %887 = vmatpush1.bf16.msra.mxu0 0
        %888 = vmatprep.subr.bf16.mxu0 0
        %889 = vmatpush1.bf16.msra.mxu0 0
        %890 = vmatprep.subr.bf16.mxu0 0
        %891 = vmatpush1.bf16.msra.mxu0 0
        %892 = vmatprep.subr.bf16.mxu0 0
        %893 = vmatpush1.bf16.msra.mxu0 0
        %894 = vmatprep.subr.bf16.mxu0 0
        %895 = vmatpush1.bf16.msra.mxu0 0
        %896 = vmatprep.subr.bf16.mxu0 0
        %897 = vmatpush1.bf16.msra.mxu0 0
        %898 = vmatprep.subr.bf16.mxu0 0
        %899 = vmatpush1.bf16.msra.mxu0 0
        %900 = vmatprep.subr.bf16.mxu0 0
        %901 = vmatpush1.bf16.msra.mxu0 0
        %902 = vmatprep.mubr.bf16.mxu0 0
        %903 = vmatmul.mubr.bf16.gmra.mrb[0].mxu0 %v868
        %v904 = vpop.f32.mrb[0].mxu0
        %v905 = vadd.f32 %v656, %v904
        %v906 = vpop.f32.mrb[0].mxu0
        %v907 = vpop.f32.mrb[0].mxu0
        %v908 = vpop.f32.mrb[0].mxu0
        %909 = vdwg.mxu0
        %v910 = vtanh.pop %v905
        %912 = vset.pattern.permute.xlu0 0
        %913 = vperm.xlu0 %912, %v862
        %v914 = vpop.permute.xlu0 %913
        %v916 = vmul.f32 %v914, %v910
        %917 = vmatprep.subr.bf16.mxu0 0
        %918 = vmatpush1.bf16.msra.mxu0 %v729
        %919 = vmatprep.subr.bf16.mxu0 0
        %920 = vmatpush1.bf16.msra.mxu0 %v730
        %921 = vmatprep.subr.bf16.mxu0 0
        %922 = vmatpush1.bf16.msra.mxu0 0
        %923 = vmatprep.subr.bf16.mxu0 0
        %924 = vmatpush1.bf16.msra.mxu0 0
        %925 = vmatprep.subr.bf16.mxu0 0
        %926 = vmatpush1.bf16.msra.mxu0 0
        %927 = vmatprep.subr.bf16.mxu0 0
        %928 = vmatpush1.bf16.msra.mxu0 0
        %929 = vmatprep.subr.bf16.mxu0 0
        %930 = vmatpush1.bf16.msra.mxu0 0
        %931 = vmatprep.subr.bf16.mxu0 0
        %932 = vmatpush1.bf16.msra.mxu0 0
        %933 = vmatprep.subr.bf16.mxu0 0
        %934 = vmatpush1.bf16.msra.mxu0 0
        %935 = vmatprep.subr.bf16.mxu0 0
        %936 = vmatpush1.bf16.msra.mxu0 0
        %937 = vmatprep.subr.bf16.mxu0 0
        %938 = vmatpush1.bf16.msra.mxu0 0
        %939 = vmatprep.subr.bf16.mxu0 0
        %940 = vmatpush1.bf16.msra.mxu0 0
        %941 = vmatprep.subr.bf16.mxu0 0
        %942 = vmatpush1.bf16.msra.mxu0 0
        %943 = vmatprep.subr.bf16.mxu0 0
        %944 = vmatpush1.bf16.msra.mxu0 0
        %945 = vmatprep.subr.bf16.mxu0 0
        %946 = vmatpush1.bf16.msra.mxu0 0
        %947 = vmatprep.subr.bf16.mxu0 0
        %948 = vmatpush1.bf16.msra.mxu0 0
        %949 = vmatprep.mubr.bf16.mxu0 0
        %950 = vmatmul.mubr.bf16.gmra.mrb[0].mxu0 %v868
        %v951 = vpop.f32.mrb[0].mxu0
        %v952 = vadd.f32 0.0, %v951
        %v953 = vpop.f32.mrb[0].mxu0
        %v954 = vpop.f32.mrb[0].mxu0
        %v955 = vpop.f32.mrb[0].mxu0
        %956 = vdwg.mxu0
        %v957 = vadd.f32 %v860, %v952
        %v958 = vpack.c.bf16 %v916, %v916
        %v960 = vsel %vm670, %v958, 0
        %962 = vmatprep.subr.bf16.mxu0 0
        %963 = vmatpush1.bf16.msra.mxu0 %v783
        %964 = vmatprep.subr.bf16.mxu0 0
        %965 = vmatpush1.bf16.msra.mxu0 %v784
        %966 = vmatprep.subr.bf16.mxu0 0
        %967 = vmatpush1.bf16.msra.mxu0 0
        %968 = vmatprep.subr.bf16.mxu0 0
        %969 = vmatpush1.bf16.msra.mxu0 0
        %970 = vmatprep.subr.bf16.mxu0 0
        %971 = vmatpush1.bf16.msra.mxu0 0
        %972 = vmatprep.subr.bf16.mxu0 0
        %973 = vmatpush1.bf16.msra.mxu0 0
        %974 = vmatprep.subr.bf16.mxu0 0
        %975 = vmatpush1.bf16.msra.mxu0 0
        %976 = vmatprep.subr.bf16.mxu0 0
        %977 = vmatpush1.bf16.msra.mxu0 0
        %978 = vmatprep.subr.bf16.mxu0 0
        %979 = vmatpush1.bf16.msra.mxu0 0
        %980 = vmatprep.subr.bf16.mxu0 0
        %981 = vmatpush1.bf16.msra.mxu0 0
        %982 = vmatprep.subr.bf16.mxu0 0
        %983 = vmatpush1.bf16.msra.mxu0 0
        %984 = vmatprep.subr.bf16.mxu0 0
        %985 = vmatpush1.bf16.msra.mxu0 0
        %986 = vmatprep.subr.bf16.mxu0 0
        %987 = vmatpush1.bf16.msra.mxu0 0
        %988 = vmatprep.subr.bf16.mxu0 0
        %989 = vmatpush1.bf16.msra.mxu0 0
        %990 = vmatprep.subr.bf16.mxu0 0
        %991 = vmatpush1.bf16.msra.mxu0 0
        %992 = vmatprep.subr.bf16.mxu0 0
        %993 = vmatpush1.bf16.msra.mxu0 0
        %994 = vmatprep.mubr.bf16.mxu0 0
        %995 = vmatmul.mubr.bf16.gmra.mrb[0].mxu0 %v960
        %v996 = vpop.f32.mrb[0].mxu0
        %v997 = vadd.f32 0.0, %v996
        %v998 = vpop.f32.mrb[0].mxu0
        %v999 = vpop.f32.mrb[0].mxu0
        %v1000 = vpop.f32.mrb[0].mxu0
        %1001 = vdwg.mxu0
        %v1002 = vadd.f32 %v957, %v997
        %v1003 = vxor.u32 %v1002, 2147483648
        %v1004 = vmul.f32 %v1003, 1.442695
        %v1005 = vpow.pop %v1004
        %v1006 = vadd.f32 %v1005, 1.0
        %v1007 = vrcp.pop %v1006
        %v1008 = vmul.f32 1.0, %v1007
        %v1009 = vtanh.pop %v1002
        %v1010 = vmul.f32 %v1008, %v852
        %1012 = vrot.lane.b32.xlu0 %v1009, 64
        %v1013 = vpop.permute.xlu0 %1012
        %v1015 = vmul.f32 %v1008, %v1013
        %1017 = vrot.lane.b32.xlu0 %v1015, 32
        %v1018 = vpop.permute.xlu0 %1017
        %v1020 = vadd.f32 %v1010, %v1018
        %v1021 = vtanh.pop %v1020
        %1023 = vrot.lane.b32.xlu0 %v1021, 64
        %v1024 = vpop.permute.xlu0 %1023
        %v1026 = vmul.f32 %v1008, %v1024
        %s1027 = scalar_lea.vmem [#allocation2], 16
        %v1028 = vld [vmem:[%s1027] sm:$0xff]
        %s1029 = scalar_lea.vmem [#allocation3], 16
        %v1030 = vld [vmem:[%s1029] sm:$0xff]
        %v1031 = vpack.c.bf16 %v1026, %v1026
        %1033 = vrot.lane.b32.xlu0 %v1031, 32
        %v1034 = vpop.permute.xlu0 %1033
        %v1036 = vsel %vm670, %v1034, 0
        %1038 = vmatprep.subr.bf16.mxu0 0
        %1039 = vmatpush1.bf16.msra.mxu0 %v666
        %1040 = vmatprep.subr.bf16.mxu0 0
        %1041 = vmatpush1.bf16.msra.mxu0 %v667
        %1042 = vmatprep.subr.bf16.mxu0 0
        %1043 = vmatpush1.bf16.msra.mxu0 0
        %1044 = vmatprep.subr.bf16.mxu0 0
        %1045 = vmatpush1.bf16.msra.mxu0 0
        %1046 = vmatprep.subr.bf16.mxu0 0
        %1047 = vmatpush1.bf16.msra.mxu0 0
        %1048 = vmatprep.subr.bf16.mxu0 0
        %1049 = vmatpush1.bf16.msra.mxu0 0
        %1050 = vmatprep.subr.bf16.mxu0 0
        %1051 = vmatpush1.bf16.msra.mxu0 0
        %1052 = vmatprep.subr.bf16.mxu0 0
        %1053 = vmatpush1.bf16.msra.mxu0 0
        %1054 = vmatprep.subr.bf16.mxu0 0
        %1055 = vmatpush1.bf16.msra.mxu0 0
        %1056 = vmatprep.subr.bf16.mxu0 0
        %1057 = vmatpush1.bf16.msra.mxu0 0
        %1058 = vmatprep.subr.bf16.mxu0 0
        %1059 = vmatpush1.bf16.msra.mxu0 0
        %1060 = vmatprep.subr.bf16.mxu0 0
        %1061 = vmatpush1.bf16.msra.mxu0 0
        %1062 = vmatprep.subr.bf16.mxu0 0
        %1063 = vmatpush1.bf16.msra.mxu0 0
        %1064 = vmatprep.subr.bf16.mxu0 0
        %1065 = vmatpush1.bf16.msra.mxu0 0
        %1066 = vmatprep.subr.bf16.mxu0 0
        %1067 = vmatpush1.bf16.msra.mxu0 0
        %1068 = vmatprep.subr.bf16.mxu0 0
        %1069 = vmatpush1.bf16.msra.mxu0 0
        %1070 = vmatprep.mubr.bf16.mxu0 0
        %1071 = vmatmul.mubr.bf16.gmra.mrb[0].mxu0 %v1036
        %v1072 = vpop.f32.mrb[0].mxu0
        %v1073 = vadd.f32 %v656, %v1072
        %v1074 = vpop.f32.mrb[0].mxu0
        %v1075 = vpop.f32.mrb[0].mxu0
        %v1076 = vpop.f32.mrb[0].mxu0
        %1077 = vdwg.mxu0
        %v1078 = vtanh.pop %v1073
        %1080 = vset.pattern.permute.xlu0 0
        %1081 = vperm.xlu0 %1080, %v1030
        %v1082 = vpop.permute.xlu0 %1081
        %v1084 = vmul.f32 %v1082, %v1078
        %1085 = vmatprep.subr.bf16.mxu0 0
        %1086 = vmatpush1.bf16.msra.mxu0 %v729
        %1087 = vmatprep.subr.bf16.mxu0 0
        %1088 = vmatpush1.bf16.msra.mxu0 %v730
        %1089 = vmatprep.subr.bf16.mxu0 0
        %1090 = vmatpush1.bf16.msra.mxu0 0
        %1091 = vmatprep.subr.bf16.mxu0 0
        %1092 = vmatpush1.bf16.msra.mxu0 0
        %1093 = vmatprep.subr.bf16.mxu0 0
        %1094 = vmatpush1.bf16.msra.mxu0 0
        %1095 = vmatprep.subr.bf16.mxu0 0
        %1096 = vmatpush1.bf16.msra.mxu0 0
        %1097 = vmatprep.subr.bf16.mxu0 0
        %1098 = vmatpush1.bf16.msra.mxu0 0
        %1099 = vmatprep.subr.bf16.mxu0 0
        %1100 = vmatpush1.bf16.msra.mxu0 0
        %1101 = vmatprep.subr.bf16.mxu0 0
        %1102 = vmatpush1.bf16.msra.mxu0 0
        %1103 = vmatprep.subr.bf16.mxu0 0
        %1104 = vmatpush1.bf16.msra.mxu0 0
        %1105 = vmatprep.subr.bf16.mxu0 0
        %1106 = vmatpush1.bf16.msra.mxu0 0
        %1107 = vmatprep.subr.bf16.mxu0 0
        %1108 = vmatpush1.bf16.msra.mxu0 0
        %1109 = vmatprep.subr.bf16.mxu0 0
        %1110 = vmatpush1.bf16.msra.mxu0 0
        %1111 = vmatprep.subr.bf16.mxu0 0
        %1112 = vmatpush1.bf16.msra.mxu0 0
        %1113 = vmatprep.subr.bf16.mxu0 0
        %1114 = vmatpush1.bf16.msra.mxu0 0
        %1115 = vmatprep.subr.bf16.mxu0 0
        %1116 = vmatpush1.bf16.msra.mxu0 0
        %1117 = vmatprep.mubr.bf16.mxu0 0
        %1118 = vmatmul.mubr.bf16.gmra.mrb[0].mxu0 %v1036
        %v1119 = vpop.f32.mrb[0].mxu0
        %v1120 = vadd.f32 0.0, %v1119
        %v1121 = vpop.f32.mrb[0].mxu0
        %v1122 = vpop.f32.mrb[0].mxu0
        %v1123 = vpop.f32.mrb[0].mxu0
        %1124 = vdwg.mxu0
        %v1125 = vadd.f32 %v1028, %v1120
        %v1126 = vpack.c.bf16 %v1084, %v1084
        %v1128 = vsel %vm670, %v1126, 0
        %1130 = vmatprep.subr.bf16.mxu0 0
        %1131 = vmatpush1.bf16.msra.mxu0 %v783
        %1132 = vmatprep.subr.bf16.mxu0 0
        %1133 = vmatpush1.bf16.msra.mxu0 %v784
        %1134 = vmatprep.subr.bf16.mxu0 0
        %1135 = vmatpush1.bf16.msra.mxu0 0
        %1136 = vmatprep.subr.bf16.mxu0 0
        %1137 = vmatpush1.bf16.msra.mxu0 0
        %1138 = vmatprep.subr.bf16.mxu0 0
        %1139 = vmatpush1.bf16.msra.mxu0 0
        %1140 = vmatprep.subr.bf16.mxu0 0
        %1141 = vmatpush1.bf16.msra.mxu0 0
        %1142 = vmatprep.subr.bf16.mxu0 0
        %1143 = vmatpush1.bf16.msra.mxu0 0
        %1144 = vmatprep.subr.bf16.mxu0 0
        %1145 = vmatpush1.bf16.msra.mxu0 0
        %1146 = vmatprep.subr.bf16.mxu0 0
        %1147 = vmatpush1.bf16.msra.mxu0 0
        %1148 = vmatprep.subr.bf16.mxu0 0
        %1149 = vmatpush1.bf16.msra.mxu0 0
        %1150 = vmatprep.subr.bf16.mxu0 0
        %1151 = vmatpush1.bf16.msra.mxu0 0
        %1152 = vmatprep.subr.bf16.mxu0 0
        %1153 = vmatpush1.bf16.msra.mxu0 0
        %1154 = vmatprep.subr.bf16.mxu0 0
        %1155 = vmatpush1.bf16.msra.mxu0 0
        %1156 = vmatprep.subr.bf16.mxu0 0
        %1157 = vmatpush1.bf16.msra.mxu0 0
        %1158 = vmatprep.subr.bf16.mxu0 0
        %1159 = vmatpush1.bf16.msra.mxu0 0
        %1160 = vmatprep.subr.bf16.mxu0 0
        %1161 = vmatpush1.bf16.msra.mxu0 0
        %1162 = vmatprep.mubr.bf16.mxu0 0
        %1163 = vmatmul.mubr.bf16.gmra.mrb[0].mxu0 %v1128
        %v1164 = vpop.f32.mrb[0].mxu0
        %v1165 = vadd.f32 0.0, %v1164
        %v1166 = vpop.f32.mrb[0].mxu0
        %v1167 = vpop.f32.mrb[0].mxu0
        %v1168 = vpop.f32.mrb[0].mxu0
        %1169 = vdwg.mxu0
        %v1170 = vadd.f32 %v1125, %v1165
        %v1171 = vxor.u32 %v1170, 2147483648
        %v1172 = vmul.f32 %v1171, 1.442695
        %v1173 = vpow.pop %v1172
        %v1174 = vadd.f32 %v1173, 1.0
        %v1175 = vrcp.pop %v1174
        %v1176 = vmul.f32 1.0, %v1175
        %v1177 = vtanh.pop %v1170
        %v1178 = vmul.f32 %v1176, %v1020
        %1180 = vrot.lane.b32.xlu0 %v1177, 64
        %v1181 = vpop.permute.xlu0 %1180
        %v1183 = vmul.f32 %v1176, %v1181
        %1185 = vrot.lane.b32.xlu0 %v1183, 32
        %v1186 = vpop.permute.xlu0 %1185
        %v1188 = vadd.f32 %v1178, %v1186
        %v1189 = vtanh.pop %v1188
        %1191 = vrot.lane.b32.xlu0 %v1189, 64
        %v1192 = vpop.permute.xlu0 %1191
        %v1194 = vmul.f32 %v1176, %v1192
        %s1195 = scalar_lea.vmem [#allocation2], 24
        %v1196 = vld [vmem:[%s1195] sm:$0xff]
        %s1197 = scalar_lea.vmem [#allocation3], 24
        %v1198 = vld [vmem:[%s1197] sm:$0xff]
        %v1199 = vpack.c.bf16 %v1194, %v1194
        %1201 = vrot.lane.b32.xlu0 %v1199, 32
        %v1202 = vpop.permute.xlu0 %1201
        %v1204 = vsel %vm670, %v1202, 0
        %1206 = vmatprep.subr.bf16.mxu0 0
        %1207 = vmatpush1.bf16.msra.mxu0 %v666
        %1208 = vmatprep.subr.bf16.mxu0 0
        %1209 = vmatpush1.bf16.msra.mxu0 %v667
        %1210 = vmatprep.subr.bf16.mxu0 0
        %1211 = vmatpush1.bf16.msra.mxu0 0
        %1212 = vmatprep.subr.bf16.mxu0 0
        %1213 = vmatpush1.bf16.msra.mxu0 0
        %1214 = vmatprep.subr.bf16.mxu0 0
        %1215 = vmatpush1.bf16.msra.mxu0 0
        %1216 = vmatprep.subr.bf16.mxu0 0
        %1217 = vmatpush1.bf16.msra.mxu0 0
        %1218 = vmatprep.subr.bf16.mxu0 0
        %1219 = vmatpush1.bf16.msra.mxu0 0
        %1220 = vmatprep.subr.bf16.mxu0 0
        %1221 = vmatpush1.bf16.msra.mxu0 0
        %1222 = vmatprep.subr.bf16.mxu0 0
        %1223 = vmatpush1.bf16.msra.mxu0 0
        %1224 = vmatprep.subr.bf16.mxu0 0
        %1225 = vmatpush1.bf16.msra.mxu0 0
        %1226 = vmatprep.subr.bf16.mxu0 0
        %1227 = vmatpush1.bf16.msra.mxu0 0
        %1228 = vmatprep.subr.bf16.mxu0 0
        %1229 = vmatpush1.bf16.msra.mxu0 0
        %1230 = vmatprep.subr.bf16.mxu0 0
        %1231 = vmatpush1.bf16.msra.mxu0 0
        %1232 = vmatprep.subr.bf16.mxu0 0
        %1233 = vmatpush1.bf16.msra.mxu0 0
        %1234 = vmatprep.subr.bf16.mxu0 0
        %1235 = vmatpush1.bf16.msra.mxu0 0
        %1236 = vmatprep.subr.bf16.mxu0 0
        %1237 = vmatpush1.bf16.msra.mxu0 0
        %1238 = vmatprep.mubr.bf16.mxu0 0
        %1239 = vmatmul.mubr.bf16.gmra.mrb[0].mxu0 %v1204
        %v1240 = vpop.f32.mrb[0].mxu0
        %v1241 = vadd.f32 %v656, %v1240
        %v1242 = vpop.f32.mrb[0].mxu0
        %v1243 = vpop.f32.mrb[0].mxu0
        %v1244 = vpop.f32.mrb[0].mxu0
        %1245 = vdwg.mxu0
        %v1246 = vtanh.pop %v1241
        %1248 = vset.pattern.permute.xlu0 0
        %1249 = vperm.xlu0 %1248, %v1198
        %v1250 = vpop.permute.xlu0 %1249
        %v1252 = vmul.f32 %v1250, %v1246
        %1253 = vmatprep.subr.bf16.mxu0 0
        %1254 = vmatpush1.bf16.msra.mxu0 %v729
        %1255 = vmatprep.subr.bf16.mxu0 0
        %1256 = vmatpush1.bf16.msra.mxu0 %v730
        %1257 = vmatprep.subr.bf16.mxu0 0
        %1258 = vmatpush1.bf16.msra.mxu0 0
        %1259 = vmatprep.subr.bf16.mxu0 0
        %1260 = vmatpush1.bf16.msra.mxu0 0
        %1261 = vmatprep.subr.bf16.mxu0 0
        %1262 = vmatpush1.bf16.msra.mxu0 0
        %1263 = vmatprep.subr.bf16.mxu0 0
        %1264 = vmatpush1.bf16.msra.mxu0 0
        %1265 = vmatprep.subr.bf16.mxu0 0
        %1266 = vmatpush1.bf16.msra.mxu0 0
        %1267 = vmatprep.subr.bf16.mxu0 0
        %1268 = vmatpush1.bf16.msra.mxu0 0
        %1269 = vmatprep.subr.bf16.mxu0 0
        %1270 = vmatpush1.bf16.msra.mxu0 0
        %1271 = vmatprep.subr.bf16.mxu0 0
        %1272 = vmatpush1.bf16.msra.mxu0 0
        %1273 = vmatprep.subr.bf16.mxu0 0
        %1274 = vmatpush1.bf16.msra.mxu0 0
        %1275 = vmatprep.subr.bf16.mxu0 0
        %1276 = vmatpush1.bf16.msra.mxu0 0
        %1277 = vmatprep.subr.bf16.mxu0 0
        %1278 = vmatpush1.bf16.msra.mxu0 0
        %1279 = vmatprep.subr.bf16.mxu0 0
        %1280 = vmatpush1.bf16.msra.mxu0 0
        %1281 = vmatprep.subr.bf16.mxu0 0
        %1282 = vmatpush1.bf16.msra.mxu0 0
        %1283 = vmatprep.subr.bf16.mxu0 0
        %1284 = vmatpush1.bf16.msra.mxu0 0
        %1285 = vmatprep.mubr.bf16.mxu0 0
        %1286 = vmatmul.mubr.bf16.gmra.mrb[0].mxu0 %v1204
        %v1287 = vpop.f32.mrb[0].mxu0
        %v1288 = vadd.f32 0.0, %v1287
        %v1289 = vpop.f32.mrb[0].mxu0
        %v1290 = vpop.f32.mrb[0].mxu0
        %v1291 = vpop.f32.mrb[0].mxu0
        %1292 = vdwg.mxu0
        %v1293 = vadd.f32 %v1196, %v1288
        %v1294 = vpack.c.bf16 %v1252, %v1252
        %v1296 = vsel %vm670, %v1294, 0
        %1298 = vmatprep.subr.bf16.mxu0 0
        %1299 = vmatpush1.bf16.msra.mxu0 %v783
        %1300 = vmatprep.subr.bf16.mxu0 0
        %1301 = vmatpush1.bf16.msra.mxu0 %v784
        %1302 = vmatprep.subr.bf16.mxu0 0
        %1303 = vmatpush1.bf16.msra.mxu0 0
        %1304 = vmatprep.subr.bf16.mxu0 0
        %1305 = vmatpush1.bf16.msra.mxu0 0
        %1306 = vmatprep.subr.bf16.mxu0 0
        %1307 = vmatpush1.bf16.msra.mxu0 0
        %1308 = vmatprep.subr.bf16.mxu0 0
        %1309 = vmatpush1.bf16.msra.mxu0 0
        %1310 = vmatprep.subr.bf16.mxu0 0
        %1311 = vmatpush1.bf16.msra.mxu0 0
        %1312 = vmatprep.subr.bf16.mxu0 0
        %1313 = vmatpush1.bf16.msra.mxu0 0
        %1314 = vmatprep.subr.bf16.mxu0 0
        %1315 = vmatpush1.bf16.msra.mxu0 0
        %1316 = vmatprep.subr.bf16.mxu0 0
        %1317 = vmatpush1.bf16.msra.mxu0 0
        %1318 = vmatprep.subr.bf16.mxu0 0
        %1319 = vmatpush1.bf16.msra.mxu0 0
        %1320 = vmatprep.subr.bf16.mxu0 0
        %1321 = vmatpush1.bf16.msra.mxu0 0
        %1322 = vmatprep.subr.bf16.mxu0 0
        %1323 = vmatpush1.bf16.msra.mxu0 0
        %1324 = vmatprep.subr.bf16.mxu0 0
        %1325 = vmatpush1.bf16.msra.mxu0 0
        %1326 = vmatprep.subr.bf16.mxu0 0
        %1327 = vmatpush1.bf16.msra.mxu0 0
        %1328 = vmatprep.subr.bf16.mxu0 0
        %1329 = vmatpush1.bf16.msra.mxu0 0
        %1330 = vmatprep.mubr.bf16.mxu0 0
        %1331 = vmatmul.mubr.bf16.gmra.mrb[0].mxu0 %v1296
        %v1332 = vpop.f32.mrb[0].mxu0
        %v1333 = vadd.f32 0.0, %v1332
        %v1334 = vpop.f32.mrb[0].mxu0
        %v1335 = vpop.f32.mrb[0].mxu0
        %v1336 = vpop.f32.mrb[0].mxu0
        %1337 = vdwg.mxu0
        %v1338 = vadd.f32 %v1293, %v1333
        %v1339 = vxor.u32 %v1338, 2147483648
        %v1340 = vmul.f32 %v1339, 1.442695
        %v1341 = vpow.pop %v1340
        %v1342 = vadd.f32 %v1341, 1.0
        %v1343 = vrcp.pop %v1342
        %v1344 = vmul.f32 1.0, %v1343
        %v1345 = vtanh.pop %v1338
        %v1346 = vmul.f32 %v1344, %v1188
        %1348 = vrot.lane.b32.xlu0 %v1345, 64
        %v1349 = vpop.permute.xlu0 %1348
        %v1351 = vmul.f32 %v1344, %v1349
        %1353 = vrot.lane.b32.xlu0 %v1351, 32
        %v1354 = vpop.permute.xlu0 %1353
        %v1356 = vadd.f32 %v1346, %v1354
        %v1357 = vtanh.pop %v1356
        %1359 = vrot.lane.b32.xlu0 %v1357, 64
        %v1360 = vpop.permute.xlu0 %1359
        %v1362 = vmul.f32 %v1344, %v1360
        %1364 = vrot.lane.b32.xlu0 %v1362, 32
        %v1365 = vpop.permute.xlu0 %1364
        %1367 = vst.msk [vmem:[#allocation4] sm:$0xff] %vm670, %v1365
        %1369 = vrot.lane.b32.xlu0 %v1356, 96
        %v1370 = vpop.permute.xlu0 %1369
        %1372 = vst.msk [vmem:[#allocation5] sm:$0xff] %vm670, %v1370
        %p1373 = scmp.eq.s32.totalorder %s28, 1
        // Predicated region
        $region81: #{tpu_custom_call.1} parent=75 // pred_check
          %p1374 = pneg %p1373
        $region82: #{tpu_custom_call.1} parent=75 // pred_check_branch
          %1376 = sbr.rel (%p1374) target = $region84
        $region83: #{tpu_custom_call.1} parent=75 // pred_region
          %v1377 = vpack.c.bf16 %v1362, %v1362
          %v1378 = vld [vmem:[%s10] sm:$0xf]
          %v1379 = vld [vmem:[%s10 + $0x4] sm:$0xf]
          %v1380 = vld [vmem:[%s10 + $0x8] sm:$0xf]
          %v1381 = vld [vmem:[%s10 + $0xc] sm:$0xf]
          %v1382 = vld [vmem:[%s11] sm:$0x1]
          %v1384 = vlaneseq
          %v1385 = vshrl.u32 %v1384, 7
          %v1386 = vsub.s32 0, %v1385
          %v1387 = vrot.slane %v1382, %v1386
          %1390 = vrot.lane.b32.xlu0 %v1377, 32
          %v1391 = vpop.permute.xlu0 %1390
          %v1396 = vunpack.c.l.b16 %v1378
          %v1397 = vunpack.c.l.b16 %v1379
          %v1398 = vunpack.c.l.b16 %v1380
          %v1399 = vunpack.c.l.b16 %v1381
          %v1400 = vpack.c.b16 %v1397, %v1396
          %v1401 = vpack.c.b16 %v1399, %v1398
          %v1405 = vsel %vm670, %v1391, 0
          %1407 = vmatprep.subr.bf16.mxu0 0
          %1408 = vmatpush1.bf16.msra.mxu0 %v1400
          %1409 = vmatprep.subr.bf16.mxu0 0
          %1410 = vmatpush1.bf16.msra.mxu0 %v1401
          %1411 = vmatprep.subr.bf16.mxu0 0
          %1412 = vmatpush1.bf16.msra.mxu0 0
          %1413 = vmatprep.subr.bf16.mxu0 0
          %1414 = vmatpush1.bf16.msra.mxu0 0
          %1415 = vmatprep.subr.bf16.mxu0 0
          %1416 = vmatpush1.bf16.msra.mxu0 0
          %1417 = vmatprep.subr.bf16.mxu0 0
          %1418 = vmatpush1.bf16.msra.mxu0 0
          %1419 = vmatprep.subr.bf16.mxu0 0
          %1420 = vmatpush1.bf16.msra.mxu0 0
          %1421 = vmatprep.subr.bf16.mxu0 0
          %1422 = vmatpush1.bf16.msra.mxu0 0
          %1423 = vmatprep.subr.bf16.mxu0 0
          %1424 = vmatpush1.bf16.msra.mxu0 0
          %1425 = vmatprep.subr.bf16.mxu0 0
          %1426 = vmatpush1.bf16.msra.mxu0 0
          %1427 = vmatprep.subr.bf16.mxu0 0
          %1428 = vmatpush1.bf16.msra.mxu0 0
          %1429 = vmatprep.subr.bf16.mxu0 0
          %1430 = vmatpush1.bf16.msra.mxu0 0
          %1431 = vmatprep.subr.bf16.mxu0 0
          %1432 = vmatpush1.bf16.msra.mxu0 0
          %1433 = vmatprep.subr.bf16.mxu0 0
          %1434 = vmatpush1.bf16.msra.mxu0 0
          %1435 = vmatprep.subr.bf16.mxu0 0
          %1436 = vmatpush1.bf16.msra.mxu0 0
          %1437 = vmatprep.subr.bf16.mxu0 0
          %1438 = vmatpush1.bf16.msra.mxu0 0
          %1439 = vmatprep.mubr.bf16.mxu0 0
          %1440 = vmatmul.mubr.bf16.gmra.mrb[0].mxu0 %v1405
          %v1441 = vpop.f32.mrb[0].mxu0
          %v1442 = vadd.f32 %v1387, %v1441
          %v1443 = vpop.f32.mrb[0].mxu0
          %v1444 = vpop.f32.mrb[0].mxu0
          %v1445 = vpop.f32.mrb[0].mxu0
          %1446 = vdwg.mxu0
          %v1447 = vmax.f32 %v1442, -20.0
          %v1448 = vmin.f32 %v1447, 2.0
          %v1449 = vmul.f32 %v1448, 1.442695
          %v1450 = vpow.pop %v1449
          %v1451 = vld [vmem:[%s2] sm:$0xff]
          %1453 = vrot.lane.b32.xlu0 %v1451, 8
          %v1454 = vpop.permute.xlu0 %1453
          %v1456 = vmul.f32 %v1450, %v1454
          %1458 = vrot.lane.b32.xlu0 %v1456, 120
          %v1459 = vpop.permute.xlu0 %1458
          %v1461 = vadd.f32 %v1442, %v1459
          %v1462 = vmul.f32 %v1451, %v1451
          %v1463 = vmul.f32 %v1462, -0.5
          %1465 = vrot.lane.b32.xlu0 %v1448, 120
          %v1466 = vpop.permute.xlu0 %1465
          %v1468 = vsub.f32 %v1463, %v1466
          %vm1469 = vcmask 64512
          %v1470 = vsel %vm1469, %v1468, 0.0
          %1471 = vadd.xlane.f32.xlu0 %v1470
          %v1472 = vpop.xlane.xlu0 %1471
          %v1473 = vsub.f32 %v1472, 7.351508
          %1475 = vrot.lane.b32.xlu0 %v1442, 8
          %v1476 = vpop.permute.xlu0 %1475
          %1479 = vrot.lane.b32.xlu0 %v1450, 8
          %v1480 = vpop.permute.xlu0 %1479
          %v1482 = vsel %vm1469, %v1461, %v1476
          %vm1483 = vcmask 130048
          %v1484 = vsel %vm1483, %v1482, %v1480
          %vm1485 = vcmask 195584
          %v1486 = vsel %vm1485, %v1484, %v1473
          %v1487 = vsel %vm670, %v1486, 0.0
          %1488 = vst [vmem:[#allocation8] sm:$0xff] %v1487
        $region84: #{tpu_custom_call.1} parent=75 // pred_fallthru
          _
        // Predicated region
        $region85: #{tpu_custom_call.1} parent=75 // pred_check
          %p1489 = pneg %p345
        $region86: #{tpu_custom_call.1} parent=75 // pred_check_branch
          %1491 = sbr.rel (%p1489) target = $region88
        $region87: #{tpu_custom_call.1} parent=75 // pred_region
          %s1493 = ssub.s32 128, 128
          %1494 = vsyncadd [#allocation9], %s1493
          %s1496 = sshll.u32 [#allocation8], 4
          %s1497 = int_to_ptr.vmem [resolvable:$true] %s1496
          %1499 = dma.vmem_to_hbm [thread:$0]  %s1497, 128, %s14, [#allocation9]
        $region88: #{tpu_custom_call.1} parent=75 // pred_fallthru
          _
        // Predicated region
        $region89: #{tpu_custom_call.1} parent=75 // pred_check
          %p1500 = pneg %p345
        $region90: #{tpu_custom_call.1} parent=75 // pred_check_branch
          %1502 = sbr.rel (%p1500) target = $region92
        $region91: #{tpu_custom_call.1} parent=75 // pred_region
          %1503 = dma.done [#allocation9], 128
        $region92: #{tpu_custom_call.1} parent=75 // pred_fallthru
          _
      $region76: #{tpu_custom_call.1} parent=5 // pred_fallthru
        _
      %p1504 = scmp.le.s32.totalorder 2, %s23
      // Predicated region
      $region93: #{tpu_custom_call.1} parent=5 // pred_check
        %p1505 = pneg %p1504
      $region94: #{tpu_custom_call.1} parent=5 // pred_check_branch
        %1507 = sbr.rel (%p1505) target = $region96
      $region95: #{tpu_custom_call.1} parent=5 // pred_region
        %s1508 = ssub.s32 %s23, 2
      $region96: #{tpu_custom_call.1} parent=5 // pred_fallthru
        _
    $region6: #{tpu_custom_call.1} parent=1 // loop_footer
      %s27 = sadd.s32 1, %s23
    $region7: #{tpu_custom_call.1} parent=1 // loop_footer_branch
      %22 = sbr.rel target = $region3
    $region8: #{tpu_custom_call.1} parent=1 // loop_exit
      _
    %1509 = vsyncpa [#allocation9], 1
    %s1510 = scalar_lea.sflag [#allocation9], 1
    %1511 = vsyncpa %s1510, 1

</llo_original>
